<compile_context>
chip_gen: v7x
topology: tpu7x:2x2x1
jax: 0.10.0
libtpu: 0.0.40
codegen_flags: <defaults>
</compile_context>

<pallas_src>
import functools

import jax
import jax.numpy as jnp
import numpy as np
from jax.experimental import pallas as pl
from jax.experimental.pallas import tpu as pltpu


# ------------------------------ Fused kernel ---------------------------------
# argmax -> (one-hot @ lut_gi) batched over all timesteps -> unrolled GRU
# recurrence -> PReLU (cb) -> Linear head.
def voice_gru_kernel(vflat_ref, lut_gi_ref, whh_ref, bhh_ref,
                     alpha_cb_ref, wc_ref, bc_ref, out_ref,
                     *, n_steps, batch_p, hidden):
    H = hidden
    v = vflat_ref[...]                                        # [L*Bp, V] f32
    NV, V = v.shape

    # First-index argmax (matches jnp.argmax / torch.argmax on real scores).
    mx = jnp.max(v, axis=-1, keepdims=True)                   # [L*Bp, 1]
    ii = jax.lax.broadcasted_iota(jnp.int32, (NV, V), 1)      # [L*Bp, V]
    idx = jnp.min(jnp.where(v == mx, ii, V), axis=-1,
                  keepdims=True)                              # [L*Bp, 1]
    onehot = (ii == idx).astype(jnp.float32)                  # [L*Bp, V]

    # One batched MXU pass: embedding+MLP+input-projection via folded LUT.
    # TODO(synk): Dropout is identity here (inference); no RNG masking applied.
    gi_all = jnp.dot(onehot, lut_gi_ref[...],
                     preferred_element_type=jnp.float32)      # [L*Bp, 3H]

    whh = whh_ref[...]                                        # [H, 3H]
    bhh = bhh_ref[...]                                        # [1, 3H]

    # GRU recurrence, fully unrolled; h lives in vregs.
    h = jnp.zeros((batch_p, H), jnp.float32)
    for t in range(n_steps):                                  # static indices
        gi = gi_all[t * batch_p:(t + 1) * batch_p, :]         # aligned slice
        gh = jnp.dot(h, whh, preferred_element_type=jnp.float32) + bhh
        r = jax.nn.sigmoid(gi[:, :H] + gh[:, :H])
        z = jax.nn.sigmoid(gi[:, H:2 * H] + gh[:, H:2 * H])
        n = jnp.tanh(gi[:, 2 * H:] + r * gh[:, 2 * H:])
        h = (1.0 - z) * n + z * h

    ac = alpha_cb_ref[0]                                      # SMEM scalar
    hp = jnp.where(h >= 0, h, ac * h)                         # PReLU (cb)
    out_ref[...] = jnp.dot(hp, wc_ref[...],
                           preferred_element_type=jnp.float32) + bc_ref[...]


# ------------------------------ Wrapper --------------------------------------
def voice_in_forward(voice, params, *, max_voice_len):
    E, S, T, V = voice.shape
    B = E * S
    L = max_voice_len
    H = params["w1"].shape[1]
    Venc = params["wc"].shape[1]
    Bp = ((B + 7) // 8) * 8                                   # sublane-align batch

    # Fold Embedding -> PReLU(a) -> Linear(w1,b1) -> PReLU(ab) -> GRU input
    # projection (wih, bih) into one [V, 3H] table (parameter-only, tiny).
    aa = params["alpha_a"][0, 0]
    ab = params["alpha_ab"][0, 0]
    e = jnp.where(params["emb"] >= 0, params["emb"], aa * params["emb"])
    lut = e @ params["w1"] + params["b1"]                     # [V, H]
    lut = jnp.where(lut >= 0, lut, ab * lut)
    lut_gi = lut @ params["wih"] + params["bih"]              # [V, 3H] (bias folded)

    # Input glue: flatten episodes/steps, pad seq->L and batch->Bp, go
    # time-major and flatten to a lane-friendly 2-D slab [L*Bp, V].
    v = voice.reshape(B, T, V)
    v = jnp.pad(v, ((0, Bp - B), (0, L - T), (0, 0)))         # [Bp, L, V]
    vflat = v.transpose(1, 0, 2).reshape(L * Bp, V)           # [L*Bp, V]

    alpha_cb = params["alpha_cb"].reshape(1)                  # SMEM scalar

    enc_p = pl.pallas_call(
        functools.partial(voice_gru_kernel,
                          n_steps=L, batch_p=Bp, hidden=H),
        out_shape=jax.ShapeDtypeStruct((Bp, Venc), jnp.float32),
        grid_spec=pltpu.PrefetchScalarGridSpec(
            num_scalar_prefetch=0,
            grid=(1,),
            in_specs=[
                pl.BlockSpec((L * Bp, V), lambda i: (0, 0)),      # voice (one-hot src)
                pl.BlockSpec((V, 3 * H), lambda i: (0, 0)),       # lut_gi
                pl.BlockSpec((H, 3 * H), lambda i: (0, 0)),       # whh
                pl.BlockSpec((1, 3 * H), lambda i: (0, 0)),       # bhh
                pl.BlockSpec(memory_space=pltpu.MemorySpace.SMEM),  # alpha_cb
                pl.BlockSpec((H, Venc), lambda i: (0, 0)),        # wc
                pl.BlockSpec((1, Venc), lambda i: (0, 0)),        # bc
            ],
            out_specs=pl.BlockSpec((Bp, Venc), lambda i: (0, 0)),
        ),
        compiler_params=pltpu.CompilerParams(
            dimension_semantics=("arbitrary",)),
    )(vflat, lut_gi, params["whh"], params["bhh"], alpha_cb,
      params["wc"], params["bc"])

    return enc_p[:B].reshape(E, S, Venc)


# ------------------------- Pure-JAX reference --------------------------------
def reference_forward(voice, params, *, max_voice_len):
    E, S, T, V = voice.shape
    B = E * S
    L = max_voice_len
    H = params["w1"].shape[1]
    v = jnp.pad(voice.reshape(B, T, V), ((0, 0), (0, L - T), (0, 0)))
    idx = jnp.argmax(v, axis=-1)                             # [B, L]
    e = params["emb"][idx]                                   # [B, L, C]
    e = jnp.where(e >= 0, e, params["alpha_a"][0, 0] * e)
    a = e @ params["w1"] + params["b1"][0]
    a = jnp.where(a >= 0, a, params["alpha_ab"][0, 0] * a)

    def step(h, x):
        gi = x @ params["wih"] + params["bih"][0]
        gh = h @ params["whh"] + params["bhh"][0]
        r = jax.nn.sigmoid(gi[:, :H] + gh[:, :H])
        z = jax.nn.sigmoid(gi[:, H:2 * H] + gh[:, H:2 * H])
        n = jnp.tanh(gi[:, 2 * H:] + r * gh[:, 2 * H:])
        return (1.0 - z) * n + z * h, None

    h0 = jnp.zeros((B, H), jnp.float32)
    hT, _ = jax.lax.scan(step, h0, a.transpose(1, 0, 2))
    hp = jnp.where(hT >= 0, hT, params["alpha_cb"][0, 0] * hT)
    enc = hp @ params["wc"] + params["bc"][0]
    return enc.reshape(E, S, -1)


# --------------------------------- Main ---------------------------------------
if __name__ == "__main__":
    # args
    episodes, steps = 2, 2
    seq_len = 6
    voice_shape = 12            # args.voice_shape
    char_encode_size = 16       # args.char_encode_size
    hidden_size = 32            # args.hidden_size
    voice_encode_size = 24      # args.voice_encode_size
    max_voice_len = 8           # args.max_voice_len

    key = jax.random.PRNGKey(0)
    keys = jax.random.split(key, 12)

    def rnd(k, shape, scale=0.1):
        return (jax.random.normal(k, shape, jnp.float32) * scale)

    params = {
        "emb": rnd(keys[0], (voice_shape, char_encode_size)),
        "alpha_a": jnp.full((1, 1), 0.25, jnp.float32),          # nn.PReLU default
        "w1": rnd(keys[1], (char_encode_size, hidden_size)),     # Linear W^T
        "b1": rnd(keys[2], (1, hidden_size)),
        "alpha_ab": jnp.full((1, 1), 0.25, jnp.float32),
        "wih": rnd(keys[3], (hidden_size, 3 * hidden_size)),     # GRU W_ih^T  [r|z|n]
        "whh": rnd(keys[4], (hidden_size, 3 * hidden_size)),     # GRU W_hh^T
        "bih": rnd(keys[5], (1, 3 * hidden_size)),
        "bhh": rnd(keys[6], (1, 3 * hidden_size)),
        "alpha_cb": jnp.full((1, 1), 0.25, jnp.float32),
        "wc": rnd(keys[7], (hidden_size, voice_encode_size)),    # Linear W^T
        "bc": rnd(keys[8], (1, voice_encode_size)),
    }

    # synthetic "voice" input: [episodes, steps, seq_len, voice_shape] scores
    voice = jax.random.uniform(keys[9],
                               (episodes, steps, seq_len, voice_shape),
                               jnp.float32)

    out = voice_in_forward(voice, params, max_voice_len=max_voice_len)
    out = jax.block_until_ready(out)

    ref = reference_forward(voice, params, max_voice_len=max_voice_len)
    assert out.shape == (episodes, steps, voice_encode_size), out.shape
    np.testing.assert_allclose(np.asarray(out), np.asarray(ref),
                               rtol=1e-4, atol=1e-4)
    print("KERNEL_OK")
</pallas_src>

<mosaic_0001>
module attributes {stable_mosaic.version = 11 : i64} {
  func.func @voice_gru_kernel(%arg0: i32, %arg1: memref<64x12xf32, #tpu.memory_space<vmem>>, %arg2: memref<12x96xf32, #tpu.memory_space<vmem>>, %arg3: memref<32x96xf32, #tpu.memory_space<vmem>>, %arg4: memref<1x96xf32, #tpu.memory_space<vmem>>, %arg5: memref<1xf32, #tpu.memory_space<smem>>, %arg6: memref<32x24xf32, #tpu.memory_space<vmem>>, %arg7: memref<1x24xf32, #tpu.memory_space<vmem>>, %arg8: memref<8x24xf32, #tpu.memory_space<vmem>>) attributes {dimension_semantics = [#tpu.dimension_semantics<arbitrary>], iteration_bounds = array<i64: 1>, scalar_prefetch = 0 : i64, scratch_operands = 0 : i64, tpu.core_type = #tpu.core_type<tc>, window_params = [{pipeline_mode = #tpu.pipeline_mode<synchronous>, transform_indices = @transform_0, window_bounds = array<i64: 64, 12>}, {pipeline_mode = #tpu.pipeline_mode<synchronous>, transform_indices = @transform_1, window_bounds = array<i64: 12, 96>}, {pipeline_mode = #tpu.pipeline_mode<synchronous>, transform_indices = @transform_2, window_bounds = array<i64: 32, 96>}, {pipeline_mode = #tpu.pipeline_mode<synchronous>, transform_indices = @transform_3, window_bounds = array<i64: 1, 96>}, {transform_indices = @transform_4, window_bounds = array<i64: 1>}, {pipeline_mode = #tpu.pipeline_mode<synchronous>, transform_indices = @transform_5, window_bounds = array<i64: 32, 24>}, {pipeline_mode = #tpu.pipeline_mode<synchronous>, transform_indices = @transform_6, window_bounds = array<i64: 1, 24>}, {pipeline_mode = #tpu.pipeline_mode<synchronous>, transform_indices = @transform_7, window_bounds = array<i64: 8, 24>}]} {
    %c0 = arith.constant 0 : index
    %c0_0 = arith.constant 0 : index
    %0 = vector.load %arg1[%c0, %c0_0] : memref<64x12xf32, #tpu.memory_space<vmem>>, vector<64x12xf32>
    %cst = arith.constant dense<0xFF800000> : vector<64xf32>
    %1 = vector.multi_reduction <maximumf>, %0, %cst [1] : vector<64x12xf32> to vector<64xf32>
    %2 = vector.shape_cast %1 : vector<64xf32> to vector<64x1xf32>
    %3 = tpu.iota {dimensions = array<i32: 1>} : vector<64x12xi32>
    %4 = vector.broadcast %2 : vector<64x1xf32> to vector<64x12xf32>
    %5 = arith.cmpf oeq, %0, %4 : vector<64x12xf32>
    %c12_i32 = arith.constant 12 : i32
    %6 = vector.broadcast %c12_i32 : i32 to vector<64x12xi32>
    %7 = arith.select %5, %3, %6 : vector<64x12xi1>, vector<64x12xi32>
    %cst_1 = arith.constant dense<2147483647> : vector<64xi32>
    %8 = vector.multi_reduction <minsi>, %7, %cst_1 [1] : vector<64x12xi32> to vector<64xi32>
    %9 = vector.shape_cast %8 : vector<64xi32> to vector<64x1xi32>
    %10 = vector.broadcast %9 : vector<64x1xi32> to vector<64x12xi32>
    %11 = arith.cmpi eq, %3, %10 : vector<64x12xi32>
    %12 = arith.extui %11 : vector<64x12xi1> to vector<64x12xi32>
    %13 = arith.sitofp %12 : vector<64x12xi32> to vector<64x12xf32>
    %c0_2 = arith.constant 0 : index
    %c0_3 = arith.constant 0 : index
    %14 = vector.load %arg2[%c0_2, %c0_3] : memref<12x96xf32, #tpu.memory_space<vmem>>, vector<12x96xf32>
    %cst_4 = arith.constant dense<0.000000e+00> : vector<64x96xf32>
    %15 = tpu.matmul %13, %14, %cst_4 {dimension_numbers = #tpu.dot_dimension_numbers<[1], [0], [0], [1], [0, 0, 1, 1], [], []>} : vector<64x12xf32>, vector<12x96xf32>, vector<64x96xf32> -> vector<64x96xf32>
    %c0_5 = arith.constant 0 : index
    %c0_6 = arith.constant 0 : index
    %16 = vector.load %arg3[%c0_5, %c0_6] : memref<32x96xf32, #tpu.memory_space<vmem>>, vector<32x96xf32>
    %c0_7 = arith.constant 0 : index
    %c0_8 = arith.constant 0 : index
    %17 = vector.load %arg4[%c0_7, %c0_8] : memref<1x96xf32, #tpu.memory_space<vmem>>, vector<1x96xf32>
    %cst_9 = arith.constant 0.000000e+00 : f32
    %18 = vector.broadcast %cst_9 : f32 to vector<8x32xf32>
    %19 = vector.extract_strided_slice %15 {offsets = [0, 0], sizes = [8, 96], strides = [1, 1]} : vector<64x96xf32> to vector<8x96xf32>
    %cst_10 = arith.constant dense<0.000000e+00> : vector<8x96xf32>
    %20 = tpu.matmul %18, %16, %cst_10 {dimension_numbers = #tpu.dot_dimension_numbers<[1], [0], [0], [1], [0, 0, 1, 1], [], []>} : vector<8x32xf32>, vector<32x96xf32>, vector<8x96xf32> -> vector<8x96xf32>
    %21 = vector.broadcast %17 : vector<1x96xf32> to vector<8x96xf32>
    %22 = arith.addf %20, %21 : vector<8x96xf32>
    %23 = vector.extract_strided_slice %19 {offsets = [0, 0], sizes = [8, 32], strides = [1, 1]} : vector<8x96xf32> to vector<8x32xf32>
    %24 = vector.extract_strided_slice %22 {offsets = [0, 0], sizes = [8, 32], strides = [1, 1]} : vector<8x96xf32> to vector<8x32xf32>
    %25 = arith.addf %23, %24 : vector<8x32xf32>
    %26 = arith.negf %25 : vector<8x32xf32>
    %27 = math.exp %26 : vector<8x32xf32>
    %cst_11 = arith.constant 1.000000e+00 : f32
    %28 = vector.broadcast %cst_11 : f32 to vector<8x32xf32>
    %29 = arith.addf %28, %27 : vector<8x32xf32>
    %30 = arith.divf %28, %29 : vector<8x32xf32>
    %31 = vector.extract_strided_slice %19 {offsets = [0, 32], sizes = [8, 32], strides = [1, 1]} : vector<8x96xf32> to vector<8x32xf32>
    %32 = vector.extract_strided_slice %22 {offsets = [0, 32], sizes = [8, 32], strides = [1, 1]} : vector<8x96xf32> to vector<8x32xf32>
    %33 = arith.addf %31, %32 : vector<8x32xf32>
    %34 = arith.negf %33 : vector<8x32xf32>
    %35 = math.exp %34 : vector<8x32xf32>
    %cst_12 = arith.constant 1.000000e+00 : f32
    %36 = vector.broadcast %cst_12 : f32 to vector<8x32xf32>
    %37 = arith.addf %36, %35 : vector<8x32xf32>
    %38 = arith.divf %36, %37 : vector<8x32xf32>
    %39 = vector.extract_strided_slice %19 {offsets = [0, 64], sizes = [8, 32], strides = [1, 1]} : vector<8x96xf32> to vector<8x32xf32>
    %40 = vector.extract_strided_slice %22 {offsets = [0, 64], sizes = [8, 32], strides = [1, 1]} : vector<8x96xf32> to vector<8x32xf32>
    %41 = arith.mulf %30, %40 : vector<8x32xf32>
    %42 = arith.addf %39, %41 : vector<8x32xf32>
    %43 = math.tanh %42 : vector<8x32xf32>
    %cst_13 = arith.constant 1.000000e+00 : f32
    %44 = vector.broadcast %cst_13 : f32 to vector<8x32xf32>
    %45 = arith.subf %44, %38 : vector<8x32xf32>
    %46 = arith.mulf %45, %43 : vector<8x32xf32>
    %47 = arith.mulf %38, %18 : vector<8x32xf32>
    %48 = arith.addf %46, %47 : vector<8x32xf32>
    %49 = vector.extract_strided_slice %15 {offsets = [8, 0], sizes = [8, 96], strides = [1, 1]} : vector<64x96xf32> to vector<8x96xf32>
    %cst_14 = arith.constant dense<0.000000e+00> : vector<8x96xf32>
    %50 = tpu.matmul %48, %16, %cst_14 {dimension_numbers = #tpu.dot_dimension_numbers<[1], [0], [0], [1], [0, 0, 1, 1], [], []>} : vector<8x32xf32>, vector<32x96xf32>, vector<8x96xf32> -> vector<8x96xf32>
    %51 = vector.broadcast %17 : vector<1x96xf32> to vector<8x96xf32>
    %52 = arith.addf %50, %51 : vector<8x96xf32>
    %53 = vector.extract_strided_slice %49 {offsets = [0, 0], sizes = [8, 32], strides = [1, 1]} : vector<8x96xf32> to vector<8x32xf32>
    %54 = vector.extract_strided_slice %52 {offsets = [0, 0], sizes = [8, 32], strides = [1, 1]} : vector<8x96xf32> to vector<8x32xf32>
    %55 = arith.addf %53, %54 : vector<8x32xf32>
    %56 = arith.negf %55 : vector<8x32xf32>
    %57 = math.exp %56 : vector<8x32xf32>
    %cst_15 = arith.constant 1.000000e+00 : f32
    %58 = vector.broadcast %cst_15 : f32 to vector<8x32xf32>
    %59 = arith.addf %58, %57 : vector<8x32xf32>
    %60 = arith.divf %58, %59 : vector<8x32xf32>
    %61 = vector.extract_strided_slice %49 {offsets = [0, 32], sizes = [8, 32], strides = [1, 1]} : vector<8x96xf32> to vector<8x32xf32>
    %62 = vector.extract_strided_slice %52 {offsets = [0, 32], sizes = [8, 32], strides = [1, 1]} : vector<8x96xf32> to vector<8x32xf32>
    %63 = arith.addf %61, %62 : vector<8x32xf32>
    %64 = arith.negf %63 : vector<8x32xf32>
    %65 = math.exp %64 : vector<8x32xf32>
    %cst_16 = arith.constant 1.000000e+00 : f32
    %66 = vector.broadcast %cst_16 : f32 to vector<8x32xf32>
    %67 = arith.addf %66, %65 : vector<8x32xf32>
    %68 = arith.divf %66, %67 : vector<8x32xf32>
    %69 = vector.extract_strided_slice %49 {offsets = [0, 64], sizes = [8, 32], strides = [1, 1]} : vector<8x96xf32> to vector<8x32xf32>
    %70 = vector.extract_strided_slice %52 {offsets = [0, 64], sizes = [8, 32], strides = [1, 1]} : vector<8x96xf32> to vector<8x32xf32>
    %71 = arith.mulf %60, %70 : vector<8x32xf32>
    %72 = arith.addf %69, %71 : vector<8x32xf32>
    %73 = math.tanh %72 : vector<8x32xf32>
    %cst_17 = arith.constant 1.000000e+00 : f32
    %74 = vector.broadcast %cst_17 : f32 to vector<8x32xf32>
    %75 = arith.subf %74, %68 : vector<8x32xf32>
    %76 = arith.mulf %75, %73 : vector<8x32xf32>
    %77 = arith.mulf %68, %48 : vector<8x32xf32>
    %78 = arith.addf %76, %77 : vector<8x32xf32>
    %79 = vector.extract_strided_slice %15 {offsets = [16, 0], sizes = [8, 96], strides = [1, 1]} : vector<64x96xf32> to vector<8x96xf32>
    %cst_18 = arith.constant dense<0.000000e+00> : vector<8x96xf32>
    %80 = tpu.matmul %78, %16, %cst_18 {dimension_numbers = #tpu.dot_dimension_numbers<[1], [0], [0], [1], [0, 0, 1, 1], [], []>} : vector<8x32xf32>, vector<32x96xf32>, vector<8x96xf32> -> vector<8x96xf32>
    %81 = vector.broadcast %17 : vector<1x96xf32> to vector<8x96xf32>
    %82 = arith.addf %80, %81 : vector<8x96xf32>
    %83 = vector.extract_strided_slice %79 {offsets = [0, 0], sizes = [8, 32], strides = [1, 1]} : vector<8x96xf32> to vector<8x32xf32>
    %84 = vector.extract_strided_slice %82 {offsets = [0, 0], sizes = [8, 32], strides = [1, 1]} : vector<8x96xf32> to vector<8x32xf32>
    %85 = arith.addf %83, %84 : vector<8x32xf32>
    %86 = arith.negf %85 : vector<8x32xf32>
    %87 = math.exp %86 : vector<8x32xf32>
    %cst_19 = arith.constant 1.000000e+00 : f32
    %88 = vector.broadcast %cst_19 : f32 to vector<8x32xf32>
    %89 = arith.addf %88, %87 : vector<8x32xf32>
    %90 = arith.divf %88, %89 : vector<8x32xf32>
    %91 = vector.extract_strided_slice %79 {offsets = [0, 32], sizes = [8, 32], strides = [1, 1]} : vector<8x96xf32> to vector<8x32xf32>
    %92 = vector.extract_strided_slice %82 {offsets = [0, 32], sizes = [8, 32], strides = [1, 1]} : vector<8x96xf32> to vector<8x32xf32>
    %93 = arith.addf %91, %92 : vector<8x32xf32>
    %94 = arith.negf %93 : vector<8x32xf32>
    %95 = math.exp %94 : vector<8x32xf32>
    %cst_20 = arith.constant 1.000000e+00 : f32
    %96 = vector.broadcast %cst_20 : f32 to vector<8x32xf32>
    %97 = arith.addf %96, %95 : vector<8x32xf32>
    %98 = arith.divf %96, %97 : vector<8x32xf32>
    %99 = vector.extract_strided_slice %79 {offsets = [0, 64], sizes = [8, 32], strides = [1, 1]} : vector<8x96xf32> to vector<8x32xf32>
    %100 = vector.extract_strided_slice %82 {offsets = [0, 64], sizes = [8, 32], strides = [1, 1]} : vector<8x96xf32> to vector<8x32xf32>
    %101 = arith.mulf %90, %100 : vector<8x32xf32>
    %102 = arith.addf %99, %101 : vector<8x32xf32>
    %103 = math.tanh %102 : vector<8x32xf32>
    %cst_21 = arith.constant 1.000000e+00 : f32
    %104 = vector.broadcast %cst_21 : f32 to vector<8x32xf32>
    %105 = arith.subf %104, %98 : vector<8x32xf32>
    %106 = arith.mulf %105, %103 : vector<8x32xf32>
    %107 = arith.mulf %98, %78 : vector<8x32xf32>
    %108 = arith.addf %106, %107 : vector<8x32xf32>
    %109 = vector.extract_strided_slice %15 {offsets = [24, 0], sizes = [8, 96], strides = [1, 1]} : vector<64x96xf32> to vector<8x96xf32>
    %cst_22 = arith.constant dense<0.000000e+00> : vector<8x96xf32>
    %110 = tpu.matmul %108, %16, %cst_22 {dimension_numbers = #tpu.dot_dimension_numbers<[1], [0], [0], [1], [0, 0, 1, 1], [], []>} : vector<8x32xf32>, vector<32x96xf32>, vector<8x96xf32> -> vector<8x96xf32>
    %111 = vector.broadcast %17 : vector<1x96xf32> to vector<8x96xf32>
    %112 = arith.addf %110, %111 : vector<8x96xf32>
    %113 = vector.extract_strided_slice %109 {offsets = [0, 0], sizes = [8, 32], strides = [1, 1]} : vector<8x96xf32> to vector<8x32xf32>
    %114 = vector.extract_strided_slice %112 {offsets = [0, 0], sizes = [8, 32], strides = [1, 1]} : vector<8x96xf32> to vector<8x32xf32>
    %115 = arith.addf %113, %114 : vector<8x32xf32>
    %116 = arith.negf %115 : vector<8x32xf32>
    %117 = math.exp %116 : vector<8x32xf32>
    %cst_23 = arith.constant 1.000000e+00 : f32
    %118 = vector.broadcast %cst_23 : f32 to vector<8x32xf32>
    %119 = arith.addf %118, %117 : vector<8x32xf32>
    %120 = arith.divf %118, %119 : vector<8x32xf32>
    %121 = vector.extract_strided_slice %109 {offsets = [0, 32], sizes = [8, 32], strides = [1, 1]} : vector<8x96xf32> to vector<8x32xf32>
    %122 = vector.extract_strided_slice %112 {offsets = [0, 32], sizes = [8, 32], strides = [1, 1]} : vector<8x96xf32> to vector<8x32xf32>
    %123 = arith.addf %121, %122 : vector<8x32xf32>
    %124 = arith.negf %123 : vector<8x32xf32>
    %125 = math.exp %124 : vector<8x32xf32>
    %cst_24 = arith.constant 1.000000e+00 : f32
    %126 = vector.broadcast %cst_24 : f32 to vector<8x32xf32>
    %127 = arith.addf %126, %125 : vector<8x32xf32>
    %128 = arith.divf %126, %127 : vector<8x32xf32>
    %129 = vector.extract_strided_slice %109 {offsets = [0, 64], sizes = [8, 32], strides = [1, 1]} : vector<8x96xf32> to vector<8x32xf32>
    %130 = vector.extract_strided_slice %112 {offsets = [0, 64], sizes = [8, 32], strides = [1, 1]} : vector<8x96xf32> to vector<8x32xf32>
    %131 = arith.mulf %120, %130 : vector<8x32xf32>
    %132 = arith.addf %129, %131 : vector<8x32xf32>
    %133 = math.tanh %132 : vector<8x32xf32>
    %cst_25 = arith.constant 1.000000e+00 : f32
    %134 = vector.broadcast %cst_25 : f32 to vector<8x32xf32>
    %135 = arith.subf %134, %128 : vector<8x32xf32>
    %136 = arith.mulf %135, %133 : vector<8x32xf32>
    %137 = arith.mulf %128, %108 : vector<8x32xf32>
    %138 = arith.addf %136, %137 : vector<8x32xf32>
    %139 = vector.extract_strided_slice %15 {offsets = [32, 0], sizes = [8, 96], strides = [1, 1]} : vector<64x96xf32> to vector<8x96xf32>
    %cst_26 = arith.constant dense<0.000000e+00> : vector<8x96xf32>
    %140 = tpu.matmul %138, %16, %cst_26 {dimension_numbers = #tpu.dot_dimension_numbers<[1], [0], [0], [1], [0, 0, 1, 1], [], []>} : vector<8x32xf32>, vector<32x96xf32>, vector<8x96xf32> -> vector<8x96xf32>
    %141 = vector.broadcast %17 : vector<1x96xf32> to vector<8x96xf32>
    %142 = arith.addf %140, %141 : vector<8x96xf32>
    %143 = vector.extract_strided_slice %139 {offsets = [0, 0], sizes = [8, 32], strides = [1, 1]} : vector<8x96xf32> to vector<8x32xf32>
    %144 = vector.extract_strided_slice %142 {offsets = [0, 0], sizes = [8, 32], strides = [1, 1]} : vector<8x96xf32> to vector<8x32xf32>
    %145 = arith.addf %143, %144 : vector<8x32xf32>
    %146 = arith.negf %145 : vector<8x32xf32>
    %147 = math.exp %146 : vector<8x32xf32>
    %cst_27 = arith.constant 1.000000e+00 : f32
    %148 = vector.broadcast %cst_27 : f32 to vector<8x32xf32>
    %149 = arith.addf %148, %147 : vector<8x32xf32>
    %150 = arith.divf %148, %149 : vector<8x32xf32>
    %151 = vector.extract_strided_slice %139 {offsets = [0, 32], sizes = [8, 32], strides = [1, 1]} : vector<8x96xf32> to vector<8x32xf32>
    %152 = vector.extract_strided_slice %142 {offsets = [0, 32], sizes = [8, 32], strides = [1, 1]} : vector<8x96xf32> to vector<8x32xf32>
    %153 = arith.addf %151, %152 : vector<8x32xf32>
    %154 = arith.negf %153 : vector<8x32xf32>
    %155 = math.exp %154 : vector<8x32xf32>
    %cst_28 = arith.constant 1.000000e+00 : f32
    %156 = vector.broadcast %cst_28 : f32 to vector<8x32xf32>
    %157 = arith.addf %156, %155 : vector<8x32xf32>
    %158 = arith.divf %156, %157 : vector<8x32xf32>
    %159 = vector.extract_strided_slice %139 {offsets = [0, 64], sizes = [8, 32], strides = [1, 1]} : vector<8x96xf32> to vector<8x32xf32>
    %160 = vector.extract_strided_slice %142 {offsets = [0, 64], sizes = [8, 32], strides = [1, 1]} : vector<8x96xf32> to vector<8x32xf32>
    %161 = arith.mulf %150, %160 : vector<8x32xf32>
    %162 = arith.addf %159, %161 : vector<8x32xf32>
    %163 = math.tanh %162 : vector<8x32xf32>
    %cst_29 = arith.constant 1.000000e+00 : f32
    %164 = vector.broadcast %cst_29 : f32 to vector<8x32xf32>
    %165 = arith.subf %164, %158 : vector<8x32xf32>
    %166 = arith.mulf %165, %163 : vector<8x32xf32>
    %167 = arith.mulf %158, %138 : vector<8x32xf32>
    %168 = arith.addf %166, %167 : vector<8x32xf32>
    %169 = vector.extract_strided_slice %15 {offsets = [40, 0], sizes = [8, 96], strides = [1, 1]} : vector<64x96xf32> to vector<8x96xf32>
    %cst_30 = arith.constant dense<0.000000e+00> : vector<8x96xf32>
    %170 = tpu.matmul %168, %16, %cst_30 {dimension_numbers = #tpu.dot_dimension_numbers<[1], [0], [0], [1], [0, 0, 1, 1], [], []>} : vector<8x32xf32>, vector<32x96xf32>, vector<8x96xf32> -> vector<8x96xf32>
    %171 = vector.broadcast %17 : vector<1x96xf32> to vector<8x96xf32>
    %172 = arith.addf %170, %171 : vector<8x96xf32>
    %173 = vector.extract_strided_slice %169 {offsets = [0, 0], sizes = [8, 32], strides = [1, 1]} : vector<8x96xf32> to vector<8x32xf32>
    %174 = vector.extract_strided_slice %172 {offsets = [0, 0], sizes = [8, 32], strides = [1, 1]} : vector<8x96xf32> to vector<8x32xf32>
    %175 = arith.addf %173, %174 : vector<8x32xf32>
    %176 = arith.negf %175 : vector<8x32xf32>
    %177 = math.exp %176 : vector<8x32xf32>
    %cst_31 = arith.constant 1.000000e+00 : f32
    %178 = vector.broadcast %cst_31 : f32 to vector<8x32xf32>
    %179 = arith.addf %178, %177 : vector<8x32xf32>
    %180 = arith.divf %178, %179 : vector<8x32xf32>
    %181 = vector.extract_strided_slice %169 {offsets = [0, 32], sizes = [8, 32], strides = [1, 1]} : vector<8x96xf32> to vector<8x32xf32>
    %182 = vector.extract_strided_slice %172 {offsets = [0, 32], sizes = [8, 32], strides = [1, 1]} : vector<8x96xf32> to vector<8x32xf32>
    %183 = arith.addf %181, %182 : vector<8x32xf32>
    %184 = arith.negf %183 : vector<8x32xf32>
    %185 = math.exp %184 : vector<8x32xf32>
    %cst_32 = arith.constant 1.000000e+00 : f32
    %186 = vector.broadcast %cst_32 : f32 to vector<8x32xf32>
    %187 = arith.addf %186, %185 : vector<8x32xf32>
    %188 = arith.divf %186, %187 : vector<8x32xf32>
    %189 = vector.extract_strided_slice %169 {offsets = [0, 64], sizes = [8, 32], strides = [1, 1]} : vector<8x96xf32> to vector<8x32xf32>
    %190 = vector.extract_strided_slice %172 {offsets = [0, 64], sizes = [8, 32], strides = [1, 1]} : vector<8x96xf32> to vector<8x32xf32>
    %191 = arith.mulf %180, %190 : vector<8x32xf32>
    %192 = arith.addf %189, %191 : vector<8x32xf32>
    %193 = math.tanh %192 : vector<8x32xf32>
    %cst_33 = arith.constant 1.000000e+00 : f32
    %194 = vector.broadcast %cst_33 : f32 to vector<8x32xf32>
    %195 = arith.subf %194, %188 : vector<8x32xf32>
    %196 = arith.mulf %195, %193 : vector<8x32xf32>
    %197 = arith.mulf %188, %168 : vector<8x32xf32>
    %198 = arith.addf %196, %197 : vector<8x32xf32>
    %199 = vector.extract_strided_slice %15 {offsets = [48, 0], sizes = [8, 96], strides = [1, 1]} : vector<64x96xf32> to vector<8x96xf32>
    %cst_34 = arith.constant dense<0.000000e+00> : vector<8x96xf32>
    %200 = tpu.matmul %198, %16, %cst_34 {dimension_numbers = #tpu.dot_dimension_numbers<[1], [0], [0], [1], [0, 0, 1, 1], [], []>} : vector<8x32xf32>, vector<32x96xf32>, vector<8x96xf32> -> vector<8x96xf32>
    %201 = vector.broadcast %17 : vector<1x96xf32> to vector<8x96xf32>
    %202 = arith.addf %200, %201 : vector<8x96xf32>
    %203 = vector.extract_strided_slice %199 {offsets = [0, 0], sizes = [8, 32], strides = [1, 1]} : vector<8x96xf32> to vector<8x32xf32>
    %204 = vector.extract_strided_slice %202 {offsets = [0, 0], sizes = [8, 32], strides = [1, 1]} : vector<8x96xf32> to vector<8x32xf32>
    %205 = arith.addf %203, %204 : vector<8x32xf32>
    %206 = arith.negf %205 : vector<8x32xf32>
    %207 = math.exp %206 : vector<8x32xf32>
    %cst_35 = arith.constant 1.000000e+00 : f32
    %208 = vector.broadcast %cst_35 : f32 to vector<8x32xf32>
    %209 = arith.addf %208, %207 : vector<8x32xf32>
    %210 = arith.divf %208, %209 : vector<8x32xf32>
    %211 = vector.extract_strided_slice %199 {offsets = [0, 32], sizes = [8, 32], strides = [1, 1]} : vector<8x96xf32> to vector<8x32xf32>
    %212 = vector.extract_strided_slice %202 {offsets = [0, 32], sizes = [8, 32], strides = [1, 1]} : vector<8x96xf32> to vector<8x32xf32>
    %213 = arith.addf %211, %212 : vector<8x32xf32>
    %214 = arith.negf %213 : vector<8x32xf32>
    %215 = math.exp %214 : vector<8x32xf32>
    %cst_36 = arith.constant 1.000000e+00 : f32
    %216 = vector.broadcast %cst_36 : f32 to vector<8x32xf32>
    %217 = arith.addf %216, %215 : vector<8x32xf32>
    %218 = arith.divf %216, %217 : vector<8x32xf32>
    %219 = vector.extract_strided_slice %199 {offsets = [0, 64], sizes = [8, 32], strides = [1, 1]} : vector<8x96xf32> to vector<8x32xf32>
    %220 = vector.extract_strided_slice %202 {offsets = [0, 64], sizes = [8, 32], strides = [1, 1]} : vector<8x96xf32> to vector<8x32xf32>
    %221 = arith.mulf %210, %220 : vector<8x32xf32>
    %222 = arith.addf %219, %221 : vector<8x32xf32>
    %223 = math.tanh %222 : vector<8x32xf32>
    %cst_37 = arith.constant 1.000000e+00 : f32
    %224 = vector.broadcast %cst_37 : f32 to vector<8x32xf32>
    %225 = arith.subf %224, %218 : vector<8x32xf32>
    %226 = arith.mulf %225, %223 : vector<8x32xf32>
    %227 = arith.mulf %218, %198 : vector<8x32xf32>
    %228 = arith.addf %226, %227 : vector<8x32xf32>
    %229 = vector.extract_strided_slice %15 {offsets = [56, 0], sizes = [8, 96], strides = [1, 1]} : vector<64x96xf32> to vector<8x96xf32>
    %cst_38 = arith.constant dense<0.000000e+00> : vector<8x96xf32>
    %230 = tpu.matmul %228, %16, %cst_38 {dimension_numbers = #tpu.dot_dimension_numbers<[1], [0], [0], [1], [0, 0, 1, 1], [], []>} : vector<8x32xf32>, vector<32x96xf32>, vector<8x96xf32> -> vector<8x96xf32>
    %231 = vector.broadcast %17 : vector<1x96xf32> to vector<8x96xf32>
    %232 = arith.addf %230, %231 : vector<8x96xf32>
    %233 = vector.extract_strided_slice %229 {offsets = [0, 0], sizes = [8, 32], strides = [1, 1]} : vector<8x96xf32> to vector<8x32xf32>
    %234 = vector.extract_strided_slice %232 {offsets = [0, 0], sizes = [8, 32], strides = [1, 1]} : vector<8x96xf32> to vector<8x32xf32>
    %235 = arith.addf %233, %234 : vector<8x32xf32>
    %236 = arith.negf %235 : vector<8x32xf32>
    %237 = math.exp %236 : vector<8x32xf32>
    %cst_39 = arith.constant 1.000000e+00 : f32
    %238 = vector.broadcast %cst_39 : f32 to vector<8x32xf32>
    %239 = arith.addf %238, %237 : vector<8x32xf32>
    %240 = arith.divf %238, %239 : vector<8x32xf32>
    %241 = vector.extract_strided_slice %229 {offsets = [0, 32], sizes = [8, 32], strides = [1, 1]} : vector<8x96xf32> to vector<8x32xf32>
    %242 = vector.extract_strided_slice %232 {offsets = [0, 32], sizes = [8, 32], strides = [1, 1]} : vector<8x96xf32> to vector<8x32xf32>
    %243 = arith.addf %241, %242 : vector<8x32xf32>
    %244 = arith.negf %243 : vector<8x32xf32>
    %245 = math.exp %244 : vector<8x32xf32>
    %cst_40 = arith.constant 1.000000e+00 : f32
    %246 = vector.broadcast %cst_40 : f32 to vector<8x32xf32>
    %247 = arith.addf %246, %245 : vector<8x32xf32>
    %248 = arith.divf %246, %247 : vector<8x32xf32>
    %249 = vector.extract_strided_slice %229 {offsets = [0, 64], sizes = [8, 32], strides = [1, 1]} : vector<8x96xf32> to vector<8x32xf32>
    %250 = vector.extract_strided_slice %232 {offsets = [0, 64], sizes = [8, 32], strides = [1, 1]} : vector<8x96xf32> to vector<8x32xf32>
    %251 = arith.mulf %240, %250 : vector<8x32xf32>
    %252 = arith.addf %249, %251 : vector<8x32xf32>
    %253 = math.tanh %252 : vector<8x32xf32>
    %cst_41 = arith.constant 1.000000e+00 : f32
    %254 = vector.broadcast %cst_41 : f32 to vector<8x32xf32>
    %255 = arith.subf %254, %248 : vector<8x32xf32>
    %256 = arith.mulf %255, %253 : vector<8x32xf32>
    %257 = arith.mulf %248, %228 : vector<8x32xf32>
    %258 = arith.addf %256, %257 : vector<8x32xf32>
    %c0_42 = arith.constant 0 : index
    %259 = memref.load %arg5[%c0_42] : memref<1xf32, #tpu.memory_space<smem>>
    %cst_43 = arith.constant 0.000000e+00 : f32
    %260 = vector.broadcast %cst_43 : f32 to vector<8x32xf32>
    %261 = arith.cmpf oge, %258, %260 : vector<8x32xf32>
    %262 = vector.broadcast %259 : f32 to vector<8x32xf32>
    %263 = arith.mulf %262, %258 : vector<8x32xf32>
    %264 = arith.select %261, %258, %263 : vector<8x32xi1>, vector<8x32xf32>
    %c0_44 = arith.constant 0 : index
    %c0_45 = arith.constant 0 : index
    %265 = vector.load %arg6[%c0_44, %c0_45] : memref<32x24xf32, #tpu.memory_space<vmem>>, vector<32x24xf32>
    %cst_46 = arith.constant dense<0.000000e+00> : vector<8x24xf32>
    %266 = tpu.matmul %264, %265, %cst_46 {dimension_numbers = #tpu.dot_dimension_numbers<[1], [0], [0], [1], [0, 0, 1, 1], [], []>} : vector<8x32xf32>, vector<32x24xf32>, vector<8x24xf32> -> vector<8x24xf32>
    %c0_47 = arith.constant 0 : index
    %c0_48 = arith.constant 0 : index
    %267 = vector.load %arg7[%c0_47, %c0_48] : memref<1x24xf32, #tpu.memory_space<vmem>>, vector<1x24xf32>
    %268 = vector.broadcast %267 : vector<1x24xf32> to vector<8x24xf32>
    %269 = arith.addf %266, %268 : vector<8x24xf32>
    %c0_49 = arith.constant 0 : index
    %c0_50 = arith.constant 0 : index
    %270 = vector.load %arg8[%c0_49, %c0_50] : memref<8x24xf32, #tpu.memory_space<vmem>>, vector<8x24xf32>
    tpu.vector_store %arg8[%c0_49, %c0_50], %269 {strides = array<i32>} : memref<8x24xf32, #tpu.memory_space<vmem>>, vector<8x24xf32>,
    return
  }
  func.func @transform_0(%arg0: i32) -> (i32, i32) {
    %c0_i32 = arith.constant 0 : i32
    %c0_i32_0 = arith.constant 0 : i32
    %c0_i32_1 = arith.constant 0 : i32
    return %c0_i32, %c0_i32_0 : i32, i32
  }
  func.func @transform_1(%arg0: i32) -> (i32, i32) {
    %c0_i32 = arith.constant 0 : i32
    %c0_i32_0 = arith.constant 0 : i32
    %c0_i32_1 = arith.constant 0 : i32
    return %c0_i32, %c0_i32_0 : i32, i32
  }
  func.func @transform_2(%arg0: i32) -> (i32, i32) {
    %c0_i32 = arith.constant 0 : i32
    %c0_i32_0 = arith.constant 0 : i32
    %c0_i32_1 = arith.constant 0 : i32
    return %c0_i32, %c0_i32_0 : i32, i32
  }
  func.func @transform_3(%arg0: i32) -> (i32, i32) {
    %c0_i32 = arith.constant 0 : i32
    %c0_i32_0 = arith.constant 0 : i32
    %c0_i32_1 = arith.constant 0 : i32
    return %c0_i32, %c0_i32_0 : i32, i32
  }
  func.func @transform_4(%arg0: i32) -> i32 {
    %c0_i32 = arith.constant 0 : i32
    %c0_i32_0 = arith.constant 0 : i32
    return %c0_i32 : i32
  }
  func.func @transform_5(%arg0: i32) -> (i32, i32) {
    %c0_i32 = arith.constant 0 : i32
    %c0_i32_0 = arith.constant 0 : i32
    %c0_i32_1 = arith.constant 0 : i32
    return %c0_i32, %c0_i32_0 : i32, i32
  }
  func.func @transform_6(%arg0: i32) -> (i32, i32) {
    %c0_i32 = arith.constant 0 : i32
    %c0_i32_0 = arith.constant 0 : i32
    %c0_i32_1 = arith.constant 0 : i32
    return %c0_i32, %c0_i32_0 : i32, i32
  }
  func.func @transform_7(%arg0: i32) -> (i32, i32) {
    %c0_i32 = arith.constant 0 : i32
    %c0_i32_0 = arith.constant 0 : i32
    %c0_i32_1 = arith.constant 0 : i32
    return %c0_i32, %c0_i32_0 : i32, i32
  }
}

</mosaic_0001>

<llo_original>
// kernel: tpu_custom_call.1
$region0: #{tpu_custom_call.1}
  #allocation0 [shape = 'u32[]', space=smem, size = 0x4, offset = 0x4, fixed_abs, tag = 'smem constant byte address 0x4 - core index']
  #allocation1 [shape = 'u32[144,128]{1,0:T(1,128)}', space=vmem, size = 0x12000, scoped, tag = 'internal scratch']
  #allocation2 [shape = 'f32[1]{0:T(128)S(6)}', space=smem, size = 0x200, scoped, tag = 'scoped memory for tpu_custom_call.1']
  %s0 = inlined_call_operand.vmem [shape: f32[64,12], index: 0, kind: input, shape index: {}]
  %s1 = inlined_call_operand.vmem [shape: f32[12,96], index: 1, kind: input, shape index: {}]
  %s2 = inlined_call_operand.vmem [shape: f32[32,96], index: 2, kind: input, shape index: {}]
  %s3 = inlined_call_operand.vmem [shape: f32[1,96], index: 3, kind: input, shape index: {}]
  %s4 = inlined_call_operand.<no memory space> [shape: f32[1], index: 4, kind: input, shape index: {}]
  %s5 = inlined_call_operand.vmem [shape: f32[32,24], index: 5, kind: input, shape index: {}]
  %s6 = inlined_call_operand.vmem [shape: f32[1,24], index: 6, kind: input, shape index: {}]
  %s7 = inlined_call_operand.hbm [shape: f32[8,24], index: 7, kind: output, shape index: {}]
  %s8 = sld [smem:[#allocation0]]
  $region38: #{tpu_custom_call.1} parent=0
    _
  %s10 = ssub.s32 1, %s8
  %s11 = scalar_select 0, %s10, %s8
  %12 = sst [smem:[#allocation2]] %s4
  $region1: #{tpu_custom_call.1} parent=0
    #allocation3 [shape = 'u8[4096]{0}', space=vmem, size = 0x1000, scoped, tag = 'output window, operand 0, single buffered']
    #allocation4 [shape = 's32[1]{0}', space=sflag, size = 0x4, scoped, tag = 'scoped memory for tpu_custom_call.1']
    %13 = vsyncpa [#allocation4], 0
    // Predicated region
    $region2: #{tpu_custom_call.1} parent=1 // pred_check
      _
    $region3: #{tpu_custom_call.1} parent=1 // pred_check_branch
      %15 = sbr.rel (0) target = $region5
    $region4: #{tpu_custom_call.1} parent=1 // pred_region
      _
    $region5: #{tpu_custom_call.1} parent=1 // pred_fallthru
      _
    // Predicated region
    $region6: #{tpu_custom_call.1} parent=1 // pred_check
      _
    $region7: #{tpu_custom_call.1} parent=1 // pred_check_branch
      %17 = sbr.rel (0) target = $region9
    $region8: #{tpu_custom_call.1} parent=1 // pred_region
      _
    $region9: #{tpu_custom_call.1} parent=1 // pred_fallthru
      _
    // Predicated region
    $region10: #{tpu_custom_call.1} parent=1 // pred_check
      _
    $region11: #{tpu_custom_call.1} parent=1 // pred_check_branch
      %19 = sbr.rel (0) target = $region13
    $region12: #{tpu_custom_call.1} parent=1 // pred_region
      _
    $region13: #{tpu_custom_call.1} parent=1 // pred_fallthru
      _
    // Predicated region
    $region14: #{tpu_custom_call.1} parent=1 // pred_check
      _
    $region15: #{tpu_custom_call.1} parent=1 // pred_check_branch
      %21 = sbr.rel (0) target = $region17
    $region16: #{tpu_custom_call.1} parent=1 // pred_region
      _
    $region17: #{tpu_custom_call.1} parent=1 // pred_fallthru
      _
    // Predicated region
    $region18: #{tpu_custom_call.1} parent=1 // pred_check
      _
    $region19: #{tpu_custom_call.1} parent=1 // pred_check_branch
      %23 = sbr.rel (0) target = $region21
    $region20: #{tpu_custom_call.1} parent=1 // pred_region
      _
    $region21: #{tpu_custom_call.1} parent=1 // pred_fallthru
      _
    // Predicated region
    $region22: #{tpu_custom_call.1} parent=1 // pred_check
      _
    $region23: #{tpu_custom_call.1} parent=1 // pred_check_branch
      %25 = sbr.rel (0) target = $region25
    $region24: #{tpu_custom_call.1} parent=1 // pred_region
      _
    $region25: #{tpu_custom_call.1} parent=1 // pred_fallthru
      _
    // Predicated region
    $region26: #{tpu_custom_call.1} parent=1 // pred_check
      _
    $region27: #{tpu_custom_call.1} parent=1 // pred_check_branch
      %27 = sbr.rel (0) target = $region29
    $region28: #{tpu_custom_call.1} parent=1 // pred_region
      _
    $region29: #{tpu_custom_call.1} parent=1 // pred_fallthru
      _
    %v28 = vld [vmem:[%s0] sm:$0xff]
    %v29 = vld [vmem:[%s0 + $0x8] sm:$0xff]
    %v30 = vld [vmem:[%s0 + $0x10] sm:$0xff]
    %v31 = vld [vmem:[%s0 + $0x18] sm:$0xff]
    %v32 = vld [vmem:[%s0 + $0x20] sm:$0xff]
    %v33 = vld [vmem:[%s0 + $0x28] sm:$0xff]
    %v34 = vld [vmem:[%s0 + $0x30] sm:$0xff]
    %v35 = vld [vmem:[%s0 + $0x38] sm:$0xff]
    %vm36 = vcmask 97280
    %v37 = vsel %vm36, %v28, -inf
    %38 = vmax.xlane.f32.xlu0 %v37
    %v39 = vpop.xlane.xlu0 %38
    %v40 = vsel %vm36, %v29, -inf
    %41 = vmax.xlane.f32.xlu0 %v40
    %v42 = vpop.xlane.xlu0 %41
    %v43 = vsel %vm36, %v30, -inf
    %44 = vmax.xlane.f32.xlu0 %v43
    %v45 = vpop.xlane.xlu0 %44
    %v46 = vsel %vm36, %v31, -inf
    %47 = vmax.xlane.f32.xlu0 %v46
    %v48 = vpop.xlane.xlu0 %47
    %v49 = vsel %vm36, %v32, -inf
    %50 = vmax.xlane.f32.xlu0 %v49
    %v51 = vpop.xlane.xlu0 %50
    %v52 = vsel %vm36, %v33, -inf
    %53 = vmax.xlane.f32.xlu0 %v52
    %v54 = vpop.xlane.xlu0 %53
    %v55 = vsel %vm36, %v34, -inf
    %56 = vmax.xlane.f32.xlu0 %v55
    %v57 = vpop.xlane.xlu0 %56
    %v58 = vsel %vm36, %v35, -inf
    %59 = vmax.xlane.f32.xlu0 %v58
    %v60 = vpop.xlane.xlu0 %59
    %v61 = vlaneseq
    %v62 = vand.u32 %v61, 127
    %vm63 = vcmp.eq.f32.partialorder %v28, %v39
    %vm64 = vcmp.eq.f32.partialorder %v29, %v42
    %vm65 = vcmp.eq.f32.partialorder %v30, %v45
    %vm66 = vcmp.eq.f32.partialorder %v31, %v48
    %vm67 = vcmp.eq.f32.partialorder %v32, %v51
    %vm68 = vcmp.eq.f32.partialorder %v33, %v54
    %vm69 = vcmp.eq.f32.partialorder %v34, %v57
    %vm70 = vcmp.eq.f32.partialorder %v35, %v60
    %v71 = vsel %vm63, %v62, 12
    %v72 = vsel %vm64, %v62, 12
    %v73 = vsel %vm65, %v62, 12
    %v74 = vsel %vm66, %v62, 12
    %v75 = vsel %vm67, %v62, 12
    %v76 = vsel %vm68, %v62, 12
    %v77 = vsel %vm69, %v62, 12
    %v78 = vsel %vm70, %v62, 12
    %v79 = vsel %vm36, %v71, 2147483647
    %v80 = vand.u32 %v79, 65535
    %v81 = vshra.s32 %v79, 16
    %v82 = vcvt.s32.f32 %v80
    %v83 = vcvt.s32.f32 %v81
    %84 = vmin.xlane.f32.xlu0 %v83
    %v85 = vpop.xlane.xlu0 %84
    %vm86 = vcmp.eq.f32.partialorder %v83, %v85
    %v87 = vsel %vm86, %v82, inf
    %88 = vmin.xlane.f32.xlu0 %v87
    %v89 = vpop.xlane.xlu0 %88
    %v90 = vcvt.f32.s32 %v89
    %v91 = vcvt.f32.s32 %v85
    %v92 = vshll.u32 %v91, 16
    %v93 = vadd.s32 %v92, %v90
    %v94 = vsel %vm36, %v72, 2147483647
    %v95 = vand.u32 %v94, 65535
    %v96 = vshra.s32 %v94, 16
    %v97 = vcvt.s32.f32 %v95
    %v98 = vcvt.s32.f32 %v96
    %99 = vmin.xlane.f32.xlu0 %v98
    %v100 = vpop.xlane.xlu0 %99
    %vm101 = vcmp.eq.f32.partialorder %v98, %v100
    %v102 = vsel %vm101, %v97, inf
    %103 = vmin.xlane.f32.xlu0 %v102
    %v104 = vpop.xlane.xlu0 %103
    %v105 = vcvt.f32.s32 %v104
    %v106 = vcvt.f32.s32 %v100
    %v107 = vshll.u32 %v106, 16
    %v108 = vadd.s32 %v107, %v105
    %v109 = vsel %vm36, %v73, 2147483647
    %v110 = vand.u32 %v109, 65535
    %v111 = vshra.s32 %v109, 16
    %v112 = vcvt.s32.f32 %v110
    %v113 = vcvt.s32.f32 %v111
    %114 = vmin.xlane.f32.xlu0 %v113
    %v115 = vpop.xlane.xlu0 %114
    %vm116 = vcmp.eq.f32.partialorder %v113, %v115
    %v117 = vsel %vm116, %v112, inf
    %118 = vmin.xlane.f32.xlu0 %v117
    %v119 = vpop.xlane.xlu0 %118
    %v120 = vcvt.f32.s32 %v119
    %v121 = vcvt.f32.s32 %v115
    %v122 = vshll.u32 %v121, 16
    %v123 = vadd.s32 %v122, %v120
    %v124 = vsel %vm36, %v74, 2147483647
    %v125 = vand.u32 %v124, 65535
    %v126 = vshra.s32 %v124, 16
    %v127 = vcvt.s32.f32 %v125
    %v128 = vcvt.s32.f32 %v126
    %129 = vmin.xlane.f32.xlu0 %v128
    %v130 = vpop.xlane.xlu0 %129
    %vm131 = vcmp.eq.f32.partialorder %v128, %v130
    %v132 = vsel %vm131, %v127, inf
    %133 = vmin.xlane.f32.xlu0 %v132
    %v134 = vpop.xlane.xlu0 %133
    %v135 = vcvt.f32.s32 %v134
    %v136 = vcvt.f32.s32 %v130
    %v137 = vshll.u32 %v136, 16
    %v138 = vadd.s32 %v137, %v135
    %v139 = vsel %vm36, %v75, 2147483647
    %v140 = vand.u32 %v139, 65535
    %v141 = vshra.s32 %v139, 16
    %v142 = vcvt.s32.f32 %v140
    %v143 = vcvt.s32.f32 %v141
    %144 = vmin.xlane.f32.xlu0 %v143
    %v145 = vpop.xlane.xlu0 %144
    %vm146 = vcmp.eq.f32.partialorder %v143, %v145
    %v147 = vsel %vm146, %v142, inf
    %148 = vmin.xlane.f32.xlu0 %v147
    %v149 = vpop.xlane.xlu0 %148
    %v150 = vcvt.f32.s32 %v149
    %v151 = vcvt.f32.s32 %v145
    %v152 = vshll.u32 %v151, 16
    %v153 = vadd.s32 %v152, %v150
    %v154 = vsel %vm36, %v76, 2147483647
    %v155 = vand.u32 %v154, 65535
    %v156 = vshra.s32 %v154, 16
    %v157 = vcvt.s32.f32 %v155
    %v158 = vcvt.s32.f32 %v156
    %159 = vmin.xlane.f32.xlu0 %v158
    %v160 = vpop.xlane.xlu0 %159
    %vm161 = vcmp.eq.f32.partialorder %v158, %v160
    %v162 = vsel %vm161, %v157, inf
    %163 = vmin.xlane.f32.xlu0 %v162
    %v164 = vpop.xlane.xlu0 %163
    %v165 = vcvt.f32.s32 %v164
    %v166 = vcvt.f32.s32 %v160
    %v167 = vshll.u32 %v166, 16
    %v168 = vadd.s32 %v167, %v165
    %v169 = vsel %vm36, %v77, 2147483647
    %v170 = vand.u32 %v169, 65535
    %v171 = vshra.s32 %v169, 16
    %v172 = vcvt.s32.f32 %v170
    %v173 = vcvt.s32.f32 %v171
    %174 = vmin.xlane.f32.xlu0 %v173
    %v175 = vpop.xlane.xlu0 %174
    %vm176 = vcmp.eq.f32.partialorder %v173, %v175
    %v177 = vsel %vm176, %v172, inf
    %178 = vmin.xlane.f32.xlu0 %v177
    %v179 = vpop.xlane.xlu0 %178
    %v180 = vcvt.f32.s32 %v179
    %v181 = vcvt.f32.s32 %v175
    %v182 = vshll.u32 %v181, 16
    %v183 = vadd.s32 %v182, %v180
    %v184 = vsel %vm36, %v78, 2147483647
    %v185 = vand.u32 %v184, 65535
    %v186 = vshra.s32 %v184, 16
    %v187 = vcvt.s32.f32 %v185
    %v188 = vcvt.s32.f32 %v186
    %189 = vmin.xlane.f32.xlu0 %v188
    %v190 = vpop.xlane.xlu0 %189
    %vm191 = vcmp.eq.f32.partialorder %v188, %v190
    %v192 = vsel %vm191, %v187, inf
    %193 = vmin.xlane.f32.xlu0 %v192
    %v194 = vpop.xlane.xlu0 %193
    %v195 = vcvt.f32.s32 %v194
    %v196 = vcvt.f32.s32 %v190
    %v197 = vshll.u32 %v196, 16
    %v198 = vadd.s32 %v197, %v195
    %vm199 = vcmp.eq.s32.totalorder %v62, %v93
    %vm200 = vcmp.eq.s32.totalorder %v62, %v108
    %vm201 = vcmp.eq.s32.totalorder %v62, %v123
    %vm202 = vcmp.eq.s32.totalorder %v62, %v138
    %vm203 = vcmp.eq.s32.totalorder %v62, %v153
    %vm204 = vcmp.eq.s32.totalorder %v62, %v168
    %vm205 = vcmp.eq.s32.totalorder %v62, %v183
    %vm206 = vcmp.eq.s32.totalorder %v62, %v198
    %v207 = vsel %vm199, 1, 0
    %v208 = vsel %vm200, 1, 0
    %v209 = vsel %vm201, 1, 0
    %v210 = vsel %vm202, 1, 0
    %v211 = vsel %vm203, 1, 0
    %v212 = vsel %vm204, 1, 0
    %v213 = vsel %vm205, 1, 0
    %v214 = vsel %vm206, 1, 0
    %v215 = vcvt.s32.f32 %v207
    %v216 = vcvt.s32.f32 %v208
    %v217 = vcvt.s32.f32 %v209
    %v218 = vcvt.s32.f32 %v210
    %v219 = vcvt.s32.f32 %v211
    %v220 = vcvt.s32.f32 %v212
    %v221 = vcvt.s32.f32 %v213
    %v222 = vcvt.s32.f32 %v214
    %v223 = vld [vmem:[%s1] sm:$0xff]
    %v224 = vld [vmem:[%s1 + $0x8] sm:$0xf]
    %v226 = vsel %vm36, %v215, 0
    %v229 = vsel %vm36, %v216, 0
    %v232 = vsel %vm36, %v217, 0
    %v235 = vsel %vm36, %v218, 0
    %v238 = vsel %vm36, %v219, 0
    %v241 = vsel %vm36, %v220, 0
    %v244 = vsel %vm36, %v221, 0
    %v247 = vsel %vm36, %v222, 0
    %vm249 = vcmask 1043456
    %v251 = vsel %vm249, %v224, 0
    %253 = vmatprep.subr.mxu0 0.0
    %254 = vmatpush1.msra.mxu0 %v223
    %255 = vmatprep.subr.mxu0 0.0
    %256 = vmatpush1.msra.mxu0 %v251
    %257 = vmatprep.subr.mxu0 0.0
    %258 = vmatpush1.msra.mxu0 0.0
    %259 = vmatprep.subr.mxu0 0.0
    %260 = vmatpush1.msra.mxu0 0.0
    %261 = vmatprep.subr.mxu0 0.0
    %262 = vmatpush1.msra.mxu0 0.0
    %263 = vmatprep.subr.mxu0 0.0
    %264 = vmatpush1.msra.mxu0 0.0
    %265 = vmatprep.subr.mxu0 0.0
    %266 = vmatpush1.msra.mxu0 0.0
    %267 = vmatprep.subr.mxu0 0.0
    %268 = vmatpush1.msra.mxu0 0.0
    %269 = vmatprep.subr.mxu0 0.0
    %270 = vmatpush1.msra.mxu0 0.0
    %271 = vmatprep.subr.mxu0 0.0
    %272 = vmatpush1.msra.mxu0 0.0
    %273 = vmatprep.subr.mxu0 0.0
    %274 = vmatpush1.msra.mxu0 0.0
    %275 = vmatprep.subr.mxu0 0.0
    %276 = vmatpush1.msra.mxu0 0.0
    %277 = vmatprep.subr.mxu0 0.0
    %278 = vmatpush1.msra.mxu0 0.0
    %279 = vmatprep.subr.mxu0 0.0
    %280 = vmatpush1.msra.mxu0 0.0
    %281 = vmatprep.subr.mxu0 0.0
    %282 = vmatpush1.msra.mxu0 0.0
    %283 = vmatprep.subr.mxu0 0.0
    %284 = vmatpush1.msra.mxu0 0.0
    %285 = vmatprep.subr.mxu0 0.0
    %286 = vmatpush1.msra.mxu0 0.0
    %287 = vmatprep.subr.mxu0 0.0
    %288 = vmatpush1.msra.mxu0 0.0
    %289 = vmatprep.subr.mxu0 0.0
    %290 = vmatpush1.msra.mxu0 0.0
    %291 = vmatprep.subr.mxu0 0.0
    %292 = vmatpush1.msra.mxu0 0.0
    %293 = vmatprep.subr.mxu0 0.0
    %294 = vmatpush1.msra.mxu0 0.0
    %295 = vmatprep.subr.mxu0 0.0
    %296 = vmatpush1.msra.mxu0 0.0
    %297 = vmatprep.subr.mxu0 0.0
    %298 = vmatpush1.msra.mxu0 0.0
    %299 = vmatprep.subr.mxu0 0.0
    %300 = vmatpush1.msra.mxu0 0.0
    %301 = vmatprep.subr.mxu0 0.0
    %302 = vmatpush1.msra.mxu0 0.0
    %303 = vmatprep.subr.mxu0 0.0
    %304 = vmatpush1.msra.mxu0 0.0
    %305 = vmatprep.subr.mxu0 0.0
    %306 = vmatpush1.msra.mxu0 0.0
    %307 = vmatprep.subr.mxu0 0.0
    %308 = vmatpush1.msra.mxu0 0.0
    %309 = vmatprep.subr.mxu0 0.0
    %310 = vmatpush1.msra.mxu0 0.0
    %311 = vmatprep.subr.mxu0 0.0
    %312 = vmatpush1.msra.mxu0 0.0
    %313 = vmatprep.subr.mxu0 0.0
    %314 = vmatpush1.msra.mxu0 0.0
    %315 = vmatprep.subr.mxu0 0.0
    %316 = vmatpush1.msra.mxu0 0.0
    %317 = vmatprep.mubr.f32.mxu0 0.0
    %318 = vmatmul.mubr.f32.gmra.mrb[0].mxu0 %v226
    %v319 = vpop.f32.mrb[0].mxu0
    %v320 = vadd.f32 0.0, %v319
    %v321 = vpop.f32.mrb[0].mxu0
    %322 = vmatprep.mubr.f32.mxu0 0.0
    %323 = vmatmul.mubr.f32.gmra.mrb[0].mxu0 %v229
    %v324 = vpop.f32.mrb[0].mxu0
    %v325 = vadd.f32 0.0, %v324
    %v326 = vpop.f32.mrb[0].mxu0
    %327 = vmatprep.mubr.f32.mxu0 0.0
    %328 = vmatmul.mubr.f32.gmra.mrb[0].mxu0 %v232
    %v329 = vpop.f32.mrb[0].mxu0
    %v330 = vadd.f32 0.0, %v329
    %v331 = vpop.f32.mrb[0].mxu0
    %332 = vmatprep.mubr.f32.mxu0 0.0
    %333 = vmatmul.mubr.f32.gmra.mrb[0].mxu0 %v235
    %v334 = vpop.f32.mrb[0].mxu0
    %v335 = vadd.f32 0.0, %v334
    %v336 = vpop.f32.mrb[0].mxu0
    %337 = vmatprep.mubr.f32.mxu0 0.0
    %338 = vmatmul.mubr.f32.gmra.mrb[0].mxu0 %v238
    %v339 = vpop.f32.mrb[0].mxu0
    %v340 = vadd.f32 0.0, %v339
    %v341 = vpop.f32.mrb[0].mxu0
    %342 = vmatprep.mubr.f32.mxu0 0.0
    %343 = vmatmul.mubr.f32.gmra.mrb[0].mxu0 %v241
    %v344 = vpop.f32.mrb[0].mxu0
    %v345 = vadd.f32 0.0, %v344
    %v346 = vpop.f32.mrb[0].mxu0
    %347 = vmatprep.mubr.f32.mxu0 0.0
    %348 = vmatmul.mubr.f32.gmra.mrb[0].mxu0 %v244
    %v349 = vpop.f32.mrb[0].mxu0
    %v350 = vadd.f32 0.0, %v349
    %v351 = vpop.f32.mrb[0].mxu0
    %352 = vmatprep.mubr.f32.mxu0 0.0
    %353 = vmatmul.mubr.f32.gmra.mrb[0].mxu0 %v247
    %v354 = vpop.f32.mrb[0].mxu0
    %v355 = vadd.f32 0.0, %v354
    %v356 = vpop.f32.mrb[0].mxu0
    %357 = vdwg.mxu0
    %v358 = vld [vmem:[%s2] sm:$0xff]
    %v359 = vld [vmem:[%s2 + $0x8] sm:$0xff]
    %v360 = vld [vmem:[%s2 + $0x10] sm:$0xff]
    %v361 = vld [vmem:[%s2 + $0x18] sm:$0xff]
    %v362 = vld [vmem:[%s3] sm:$0x1]
    %v364 = vlaneseq
    %v365 = vshrl.u32 %v364, 7
    %v366 = vsub.s32 0, %v365
    %v367 = vrot.slane %v362, %v366
    %vm369 = vcmask 261120
    %v371 = vsel %vm369, 0.0, 0
    %373 = vmatprep.subr.mxu0 0.0
    %374 = vmatpush1.msra.mxu0 %v358
    %375 = vmatprep.subr.mxu0 0.0
    %376 = vmatpush1.msra.mxu0 %v359
    %377 = vmatprep.subr.mxu0 0.0
    %378 = vmatpush1.msra.mxu0 %v360
    %379 = vmatprep.subr.mxu0 0.0
    %380 = vmatpush1.msra.mxu0 %v361
    %381 = vmatprep.subr.mxu0 0.0
    %382 = vmatpush1.msra.mxu0 0.0
    %383 = vmatprep.subr.mxu0 0.0
    %384 = vmatpush1.msra.mxu0 0.0
    %385 = vmatprep.subr.mxu0 0.0
    %386 = vmatpush1.msra.mxu0 0.0
    %387 = vmatprep.subr.mxu0 0.0
    %388 = vmatpush1.msra.mxu0 0.0
    %389 = vmatprep.subr.mxu0 0.0
    %390 = vmatpush1.msra.mxu0 0.0
    %391 = vmatprep.subr.mxu0 0.0
    %392 = vmatpush1.msra.mxu0 0.0
    %393 = vmatprep.subr.mxu0 0.0
    %394 = vmatpush1.msra.mxu0 0.0
    %395 = vmatprep.subr.mxu0 0.0
    %396 = vmatpush1.msra.mxu0 0.0
    %397 = vmatprep.subr.mxu0 0.0
    %398 = vmatpush1.msra.mxu0 0.0
    %399 = vmatprep.subr.mxu0 0.0
    %400 = vmatpush1.msra.mxu0 0.0
    %401 = vmatprep.subr.mxu0 0.0
    %402 = vmatpush1.msra.mxu0 0.0
    %403 = vmatprep.subr.mxu0 0.0
    %404 = vmatpush1.msra.mxu0 0.0
    %405 = vmatprep.subr.mxu0 0.0
    %406 = vmatpush1.msra.mxu0 0.0
    %407 = vmatprep.subr.mxu0 0.0
    %408 = vmatpush1.msra.mxu0 0.0
    %409 = vmatprep.subr.mxu0 0.0
    %410 = vmatpush1.msra.mxu0 0.0
    %411 = vmatprep.subr.mxu0 0.0
    %412 = vmatpush1.msra.mxu0 0.0
    %413 = vmatprep.subr.mxu0 0.0
    %414 = vmatpush1.msra.mxu0 0.0
    %415 = vmatprep.subr.mxu0 0.0
    %416 = vmatpush1.msra.mxu0 0.0
    %417 = vmatprep.subr.mxu0 0.0
    %418 = vmatpush1.msra.mxu0 0.0
    %419 = vmatprep.subr.mxu0 0.0
    %420 = vmatpush1.msra.mxu0 0.0
    %421 = vmatprep.subr.mxu0 0.0
    %422 = vmatpush1.msra.mxu0 0.0
    %423 = vmatprep.subr.mxu0 0.0
    %424 = vmatpush1.msra.mxu0 0.0
    %425 = vmatprep.subr.mxu0 0.0
    %426 = vmatpush1.msra.mxu0 0.0
    %427 = vmatprep.subr.mxu0 0.0
    %428 = vmatpush1.msra.mxu0 0.0
    %429 = vmatprep.subr.mxu0 0.0
    %430 = vmatpush1.msra.mxu0 0.0
    %431 = vmatprep.subr.mxu0 0.0
    %432 = vmatpush1.msra.mxu0 0.0
    %433 = vmatprep.subr.mxu0 0.0
    %434 = vmatpush1.msra.mxu0 0.0
    %435 = vmatprep.subr.mxu0 0.0
    %436 = vmatpush1.msra.mxu0 0.0
    %437 = vmatprep.mubr.f32.mxu0 0.0
    %438 = vmatmul.mubr.f32.gmra.mrb[0].mxu0 %v371
    %v439 = vpop.f32.mrb[0].mxu0
    %v440 = vadd.f32 %v367, %v439
    %v441 = vpop.f32.mrb[0].mxu0
    %442 = vdwg.mxu0
    %v443 = vadd.f32 %v320, %v440
    %v444 = vxor.u32 %v443, 2147483648
    %v445 = vmul.f32 %v444, 1.442695
    %v446 = vpow.pop %v445
    %v447 = vadd.f32 %v446, 1.0
    %v448 = vrcp.pop %v447
    %v449 = vmul.f32 1.0, %v448
    %451 = vrot.lane.b32.xlu0 %v440, 64
    %v452 = vpop.permute.xlu0 %451
    %v454 = vmul.f32 %v449, %v452
    %456 = vrot.lane.b32.xlu0 %v454, 64
    %v457 = vpop.permute.xlu0 %456
    %v459 = vadd.f32 %v320, %v457
    %v460 = vtanh.pop %v459
    %v461 = vsub.f32 1.0, %v449
    %463 = vrot.lane.b32.xlu0 %v460, 96
    %v464 = vpop.permute.xlu0 %463
    %v466 = vmul.f32 %v461, %v464
    %v467 = vmul.f32 %v449, 0.0
    %v468 = vadd.f32 %v466, %v467
    %470 = vrot.lane.b32.xlu0 %v468, 96
    %v471 = vpop.permute.xlu0 %470
    %v472 = vsel %vm369, %v471, 0
    %474 = vmatprep.subr.mxu0 0.0
    %475 = vmatpush1.msra.mxu0 %v358
    %476 = vmatprep.subr.mxu0 0.0
    %477 = vmatpush1.msra.mxu0 %v359
    %478 = vmatprep.subr.mxu0 0.0
    %479 = vmatpush1.msra.mxu0 %v360
    %480 = vmatprep.subr.mxu0 0.0
    %481 = vmatpush1.msra.mxu0 %v361
    %482 = vmatprep.subr.mxu0 0.0
    %483 = vmatpush1.msra.mxu0 0.0
    %484 = vmatprep.subr.mxu0 0.0
    %485 = vmatpush1.msra.mxu0 0.0
    %486 = vmatprep.subr.mxu0 0.0
    %487 = vmatpush1.msra.mxu0 0.0
    %488 = vmatprep.subr.mxu0 0.0
    %489 = vmatpush1.msra.mxu0 0.0
    %490 = vmatprep.subr.mxu0 0.0
    %491 = vmatpush1.msra.mxu0 0.0
    %492 = vmatprep.subr.mxu0 0.0
    %493 = vmatpush1.msra.mxu0 0.0
    %494 = vmatprep.subr.mxu0 0.0
    %495 = vmatpush1.msra.mxu0 0.0
    %496 = vmatprep.subr.mxu0 0.0
    %497 = vmatpush1.msra.mxu0 0.0
    %498 = vmatprep.subr.mxu0 0.0
    %499 = vmatpush1.msra.mxu0 0.0
    %500 = vmatprep.subr.mxu0 0.0
    %501 = vmatpush1.msra.mxu0 0.0
    %502 = vmatprep.subr.mxu0 0.0
    %503 = vmatpush1.msra.mxu0 0.0
    %504 = vmatprep.subr.mxu0 0.0
    %505 = vmatpush1.msra.mxu0 0.0
    %506 = vmatprep.subr.mxu0 0.0
    %507 = vmatpush1.msra.mxu0 0.0
    %508 = vmatprep.subr.mxu0 0.0
    %509 = vmatpush1.msra.mxu0 0.0
    %510 = vmatprep.subr.mxu0 0.0
    %511 = vmatpush1.msra.mxu0 0.0
    %512 = vmatprep.subr.mxu0 0.0
    %513 = vmatpush1.msra.mxu0 0.0
    %514 = vmatprep.subr.mxu0 0.0
    %515 = vmatpush1.msra.mxu0 0.0
    %516 = vmatprep.subr.mxu0 0.0
    %517 = vmatpush1.msra.mxu0 0.0
    %518 = vmatprep.subr.mxu0 0.0
    %519 = vmatpush1.msra.mxu0 0.0
    %520 = vmatprep.subr.mxu0 0.0
    %521 = vmatpush1.msra.mxu0 0.0
    %522 = vmatprep.subr.mxu0 0.0
    %523 = vmatpush1.msra.mxu0 0.0
    %524 = vmatprep.subr.mxu0 0.0
    %525 = vmatpush1.msra.mxu0 0.0
    %526 = vmatprep.subr.mxu0 0.0
    %527 = vmatpush1.msra.mxu0 0.0
    %528 = vmatprep.subr.mxu0 0.0
    %529 = vmatpush1.msra.mxu0 0.0
    %530 = vmatprep.subr.mxu0 0.0
    %531 = vmatpush1.msra.mxu0 0.0
    %532 = vmatprep.subr.mxu0 0.0
    %533 = vmatpush1.msra.mxu0 0.0
    %534 = vmatprep.subr.mxu0 0.0
    %535 = vmatpush1.msra.mxu0 0.0
    %536 = vmatprep.subr.mxu0 0.0
    %537 = vmatpush1.msra.mxu0 0.0
    %538 = vmatprep.mubr.f32.mxu0 0.0
    %539 = vmatmul.mubr.f32.gmra.mrb[0].mxu0 %v472
    %v540 = vpop.f32.mrb[0].mxu0
    %v541 = vadd.f32 %v367, %v540
    %v542 = vpop.f32.mrb[0].mxu0
    %543 = vdwg.mxu0
    %v544 = vadd.f32 %v325, %v541
    %v545 = vxor.u32 %v544, 2147483648
    %v546 = vmul.f32 %v545, 1.442695
    %v547 = vpow.pop %v546
    %v548 = vadd.f32 %v547, 1.0
    %v549 = vrcp.pop %v548
    %v550 = vmul.f32 1.0, %v549
    %552 = vrot.lane.b32.xlu0 %v541, 64
    %v553 = vpop.permute.xlu0 %552
    %v555 = vmul.f32 %v550, %v553
    %557 = vrot.lane.b32.xlu0 %v555, 64
    %v558 = vpop.permute.xlu0 %557
    %v560 = vadd.f32 %v325, %v558
    %v561 = vtanh.pop %v560
    %v562 = vsub.f32 1.0, %v550
    %564 = vrot.lane.b32.xlu0 %v561, 96
    %v565 = vpop.permute.xlu0 %564
    %v567 = vmul.f32 %v562, %v565
    %v568 = vmul.f32 %v550, %v468
    %v569 = vadd.f32 %v567, %v568
    %571 = vrot.lane.b32.xlu0 %v569, 96
    %v572 = vpop.permute.xlu0 %571
    %v573 = vsel %vm369, %v572, 0
    %575 = vmatprep.subr.mxu0 0.0
    %576 = vmatpush1.msra.mxu0 %v358
    %577 = vmatprep.subr.mxu0 0.0
    %578 = vmatpush1.msra.mxu0 %v359
    %579 = vmatprep.subr.mxu0 0.0
    %580 = vmatpush1.msra.mxu0 %v360
    %581 = vmatprep.subr.mxu0 0.0
    %582 = vmatpush1.msra.mxu0 %v361
    %583 = vmatprep.subr.mxu0 0.0
    %584 = vmatpush1.msra.mxu0 0.0
    %585 = vmatprep.subr.mxu0 0.0
    %586 = vmatpush1.msra.mxu0 0.0
    %587 = vmatprep.subr.mxu0 0.0
    %588 = vmatpush1.msra.mxu0 0.0
    %589 = vmatprep.subr.mxu0 0.0
    %590 = vmatpush1.msra.mxu0 0.0
    %591 = vmatprep.subr.mxu0 0.0
    %592 = vmatpush1.msra.mxu0 0.0
    %593 = vmatprep.subr.mxu0 0.0
    %594 = vmatpush1.msra.mxu0 0.0
    %595 = vmatprep.subr.mxu0 0.0
    %596 = vmatpush1.msra.mxu0 0.0
    %597 = vmatprep.subr.mxu0 0.0
    %598 = vmatpush1.msra.mxu0 0.0
    %599 = vmatprep.subr.mxu0 0.0
    %600 = vmatpush1.msra.mxu0 0.0
    %601 = vmatprep.subr.mxu0 0.0
    %602 = vmatpush1.msra.mxu0 0.0
    %603 = vmatprep.subr.mxu0 0.0
    %604 = vmatpush1.msra.mxu0 0.0
    %605 = vmatprep.subr.mxu0 0.0
    %606 = vmatpush1.msra.mxu0 0.0
    %607 = vmatprep.subr.mxu0 0.0
    %608 = vmatpush1.msra.mxu0 0.0
    %609 = vmatprep.subr.mxu0 0.0
    %610 = vmatpush1.msra.mxu0 0.0
    %611 = vmatprep.subr.mxu0 0.0
    %612 = vmatpush1.msra.mxu0 0.0
    %613 = vmatprep.subr.mxu0 0.0
    %614 = vmatpush1.msra.mxu0 0.0
    %615 = vmatprep.subr.mxu0 0.0
    %616 = vmatpush1.msra.mxu0 0.0
    %617 = vmatprep.subr.mxu0 0.0
    %618 = vmatpush1.msra.mxu0 0.0
    %619 = vmatprep.subr.mxu0 0.0
    %620 = vmatpush1.msra.mxu0 0.0
    %621 = vmatprep.subr.mxu0 0.0
    %622 = vmatpush1.msra.mxu0 0.0
    %623 = vmatprep.subr.mxu0 0.0
    %624 = vmatpush1.msra.mxu0 0.0
    %625 = vmatprep.subr.mxu0 0.0
    %626 = vmatpush1.msra.mxu0 0.0
    %627 = vmatprep.subr.mxu0 0.0
    %628 = vmatpush1.msra.mxu0 0.0
    %629 = vmatprep.subr.mxu0 0.0
    %630 = vmatpush1.msra.mxu0 0.0
    %631 = vmatprep.subr.mxu0 0.0
    %632 = vmatpush1.msra.mxu0 0.0
    %633 = vmatprep.subr.mxu0 0.0
    %634 = vmatpush1.msra.mxu0 0.0
    %635 = vmatprep.subr.mxu0 0.0
    %636 = vmatpush1.msra.mxu0 0.0
    %637 = vmatprep.subr.mxu0 0.0
    %638 = vmatpush1.msra.mxu0 0.0
    %639 = vmatprep.mubr.f32.mxu0 0.0
    %640 = vmatmul.mubr.f32.gmra.mrb[0].mxu0 %v573
    %v641 = vpop.f32.mrb[0].mxu0
    %v642 = vadd.f32 %v367, %v641
    %v643 = vpop.f32.mrb[0].mxu0
    %644 = vdwg.mxu0
    %v645 = vadd.f32 %v330, %v642
    %v646 = vxor.u32 %v645, 2147483648
    %v647 = vmul.f32 %v646, 1.442695
    %v648 = vpow.pop %v647
    %v649 = vadd.f32 %v648, 1.0
    %v650 = vrcp.pop %v649
    %v651 = vmul.f32 1.0, %v650
    %653 = vrot.lane.b32.xlu0 %v642, 64
    %v654 = vpop.permute.xlu0 %653
    %v656 = vmul.f32 %v651, %v654
    %658 = vrot.lane.b32.xlu0 %v656, 64
    %v659 = vpop.permute.xlu0 %658
    %v661 = vadd.f32 %v330, %v659
    %v662 = vtanh.pop %v661
    %v663 = vsub.f32 1.0, %v651
    %665 = vrot.lane.b32.xlu0 %v662, 96
    %v666 = vpop.permute.xlu0 %665
    %v668 = vmul.f32 %v663, %v666
    %v669 = vmul.f32 %v651, %v569
    %v670 = vadd.f32 %v668, %v669
    %672 = vrot.lane.b32.xlu0 %v670, 96
    %v673 = vpop.permute.xlu0 %672
    %v674 = vsel %vm369, %v673, 0
    %676 = vmatprep.subr.mxu0 0.0
    %677 = vmatpush1.msra.mxu0 %v358
    %678 = vmatprep.subr.mxu0 0.0
    %679 = vmatpush1.msra.mxu0 %v359
    %680 = vmatprep.subr.mxu0 0.0
    %681 = vmatpush1.msra.mxu0 %v360
    %682 = vmatprep.subr.mxu0 0.0
    %683 = vmatpush1.msra.mxu0 %v361
    %684 = vmatprep.subr.mxu0 0.0
    %685 = vmatpush1.msra.mxu0 0.0
    %686 = vmatprep.subr.mxu0 0.0
    %687 = vmatpush1.msra.mxu0 0.0
    %688 = vmatprep.subr.mxu0 0.0
    %689 = vmatpush1.msra.mxu0 0.0
    %690 = vmatprep.subr.mxu0 0.0
    %691 = vmatpush1.msra.mxu0 0.0
    %692 = vmatprep.subr.mxu0 0.0
    %693 = vmatpush1.msra.mxu0 0.0
    %694 = vmatprep.subr.mxu0 0.0
    %695 = vmatpush1.msra.mxu0 0.0
    %696 = vmatprep.subr.mxu0 0.0
    %697 = vmatpush1.msra.mxu0 0.0
    %698 = vmatprep.subr.mxu0 0.0
    %699 = vmatpush1.msra.mxu0 0.0
    %700 = vmatprep.subr.mxu0 0.0
    %701 = vmatpush1.msra.mxu0 0.0
    %702 = vmatprep.subr.mxu0 0.0
    %703 = vmatpush1.msra.mxu0 0.0
    %704 = vmatprep.subr.mxu0 0.0
    %705 = vmatpush1.msra.mxu0 0.0
    %706 = vmatprep.subr.mxu0 0.0
    %707 = vmatpush1.msra.mxu0 0.0
    %708 = vmatprep.subr.mxu0 0.0
    %709 = vmatpush1.msra.mxu0 0.0
    %710 = vmatprep.subr.mxu0 0.0
    %711 = vmatpush1.msra.mxu0 0.0
    %712 = vmatprep.subr.mxu0 0.0
    %713 = vmatpush1.msra.mxu0 0.0
    %714 = vmatprep.subr.mxu0 0.0
    %715 = vmatpush1.msra.mxu0 0.0
    %716 = vmatprep.subr.mxu0 0.0
    %717 = vmatpush1.msra.mxu0 0.0
    %718 = vmatprep.subr.mxu0 0.0
    %719 = vmatpush1.msra.mxu0 0.0
    %720 = vmatprep.subr.mxu0 0.0
    %721 = vmatpush1.msra.mxu0 0.0
    %722 = vmatprep.subr.mxu0 0.0
    %723 = vmatpush1.msra.mxu0 0.0
    %724 = vmatprep.subr.mxu0 0.0
    %725 = vmatpush1.msra.mxu0 0.0
    %726 = vmatprep.subr.mxu0 0.0
    %727 = vmatpush1.msra.mxu0 0.0
    %728 = vmatprep.subr.mxu0 0.0
    %729 = vmatpush1.msra.mxu0 0.0
    %730 = vmatprep.subr.mxu0 0.0
    %731 = vmatpush1.msra.mxu0 0.0
    %732 = vmatprep.subr.mxu0 0.0
    %733 = vmatpush1.msra.mxu0 0.0
    %734 = vmatprep.subr.mxu0 0.0
    %735 = vmatpush1.msra.mxu0 0.0
    %736 = vmatprep.subr.mxu0 0.0
    %737 = vmatpush1.msra.mxu0 0.0
    %738 = vmatprep.subr.mxu0 0.0
    %739 = vmatpush1.msra.mxu0 0.0
    %740 = vmatprep.mubr.f32.mxu0 0.0
    %741 = vmatmul.mubr.f32.gmra.mrb[0].mxu0 %v674
    %v742 = vpop.f32.mrb[0].mxu0
    %v743 = vadd.f32 %v367, %v742
    %v744 = vpop.f32.mrb[0].mxu0
    %745 = vdwg.mxu0
    %v746 = vadd.f32 %v335, %v743
    %v747 = vxor.u32 %v746, 2147483648
    %v748 = vmul.f32 %v747, 1.442695
    %v749 = vpow.pop %v748
    %v750 = vadd.f32 %v749, 1.0
    %v751 = vrcp.pop %v750
    %v752 = vmul.f32 1.0, %v751
    %754 = vrot.lane.b32.xlu0 %v743, 64
    %v755 = vpop.permute.xlu0 %754
    %v757 = vmul.f32 %v752, %v755
    %759 = vrot.lane.b32.xlu0 %v757, 64
    %v760 = vpop.permute.xlu0 %759
    %v762 = vadd.f32 %v335, %v760
    %v763 = vtanh.pop %v762
    %v764 = vsub.f32 1.0, %v752
    %766 = vrot.lane.b32.xlu0 %v763, 96
    %v767 = vpop.permute.xlu0 %766
    %v769 = vmul.f32 %v764, %v767
    %v770 = vmul.f32 %v752, %v670
    %v771 = vadd.f32 %v769, %v770
    %773 = vrot.lane.b32.xlu0 %v771, 96
    %v774 = vpop.permute.xlu0 %773
    %v775 = vsel %vm369, %v774, 0
    %777 = vmatprep.subr.mxu0 0.0
    %778 = vmatpush1.msra.mxu0 %v358
    %779 = vmatprep.subr.mxu0 0.0
    %780 = vmatpush1.msra.mxu0 %v359
    %781 = vmatprep.subr.mxu0 0.0
    %782 = vmatpush1.msra.mxu0 %v360
    %783 = vmatprep.subr.mxu0 0.0
    %784 = vmatpush1.msra.mxu0 %v361
    %785 = vmatprep.subr.mxu0 0.0
    %786 = vmatpush1.msra.mxu0 0.0
    %787 = vmatprep.subr.mxu0 0.0
    %788 = vmatpush1.msra.mxu0 0.0
    %789 = vmatprep.subr.mxu0 0.0
    %790 = vmatpush1.msra.mxu0 0.0
    %791 = vmatprep.subr.mxu0 0.0
    %792 = vmatpush1.msra.mxu0 0.0
    %793 = vmatprep.subr.mxu0 0.0
    %794 = vmatpush1.msra.mxu0 0.0
    %795 = vmatprep.subr.mxu0 0.0
    %796 = vmatpush1.msra.mxu0 0.0
    %797 = vmatprep.subr.mxu0 0.0
    %798 = vmatpush1.msra.mxu0 0.0
    %799 = vmatprep.subr.mxu0 0.0
    %800 = vmatpush1.msra.mxu0 0.0
    %801 = vmatprep.subr.mxu0 0.0
    %802 = vmatpush1.msra.mxu0 0.0
    %803 = vmatprep.subr.mxu0 0.0
    %804 = vmatpush1.msra.mxu0 0.0
    %805 = vmatprep.subr.mxu0 0.0
    %806 = vmatpush1.msra.mxu0 0.0
    %807 = vmatprep.subr.mxu0 0.0
    %808 = vmatpush1.msra.mxu0 0.0
    %809 = vmatprep.subr.mxu0 0.0
    %810 = vmatpush1.msra.mxu0 0.0
    %811 = vmatprep.subr.mxu0 0.0
    %812 = vmatpush1.msra.mxu0 0.0
    %813 = vmatprep.subr.mxu0 0.0
    %814 = vmatpush1.msra.mxu0 0.0
    %815 = vmatprep.subr.mxu0 0.0
    %816 = vmatpush1.msra.mxu0 0.0
    %817 = vmatprep.subr.mxu0 0.0
    %818 = vmatpush1.msra.mxu0 0.0
    %819 = vmatprep.subr.mxu0 0.0
    %820 = vmatpush1.msra.mxu0 0.0
    %821 = vmatprep.subr.mxu0 0.0
    %822 = vmatpush1.msra.mxu0 0.0
    %823 = vmatprep.subr.mxu0 0.0
    %824 = vmatpush1.msra.mxu0 0.0
    %825 = vmatprep.subr.mxu0 0.0
    %826 = vmatpush1.msra.mxu0 0.0
    %827 = vmatprep.subr.mxu0 0.0
    %828 = vmatpush1.msra.mxu0 0.0
    %829 = vmatprep.subr.mxu0 0.0
    %830 = vmatpush1.msra.mxu0 0.0
    %831 = vmatprep.subr.mxu0 0.0
    %832 = vmatpush1.msra.mxu0 0.0
    %833 = vmatprep.subr.mxu0 0.0
    %834 = vmatpush1.msra.mxu0 0.0
    %835 = vmatprep.subr.mxu0 0.0
    %836 = vmatpush1.msra.mxu0 0.0
    %837 = vmatprep.subr.mxu0 0.0
    %838 = vmatpush1.msra.mxu0 0.0
    %839 = vmatprep.subr.mxu0 0.0
    %840 = vmatpush1.msra.mxu0 0.0
    %841 = vmatprep.mubr.f32.mxu0 0.0
    %842 = vmatmul.mubr.f32.gmra.mrb[0].mxu0 %v775
    %v843 = vpop.f32.mrb[0].mxu0
    %v844 = vadd.f32 %v367, %v843
    %v845 = vpop.f32.mrb[0].mxu0
    %846 = vdwg.mxu0
    %v847 = vadd.f32 %v340, %v844
    %v848 = vxor.u32 %v847, 2147483648
    %v849 = vmul.f32 %v848, 1.442695
    %v850 = vpow.pop %v849
    %v851 = vadd.f32 %v850, 1.0
    %v852 = vrcp.pop %v851
    %v853 = vmul.f32 1.0, %v852
    %855 = vrot.lane.b32.xlu0 %v844, 64
    %v856 = vpop.permute.xlu0 %855
    %v858 = vmul.f32 %v853, %v856
    %860 = vrot.lane.b32.xlu0 %v858, 64
    %v861 = vpop.permute.xlu0 %860
    %v863 = vadd.f32 %v340, %v861
    %v864 = vtanh.pop %v863
    %v865 = vsub.f32 1.0, %v853
    %867 = vrot.lane.b32.xlu0 %v864, 96
    %v868 = vpop.permute.xlu0 %867
    %v870 = vmul.f32 %v865, %v868
    %v871 = vmul.f32 %v853, %v771
    %v872 = vadd.f32 %v870, %v871
    %874 = vrot.lane.b32.xlu0 %v872, 96
    %v875 = vpop.permute.xlu0 %874
    %v876 = vsel %vm369, %v875, 0
    %878 = vmatprep.subr.mxu0 0.0
    %879 = vmatpush1.msra.mxu0 %v358
    %880 = vmatprep.subr.mxu0 0.0
    %881 = vmatpush1.msra.mxu0 %v359
    %882 = vmatprep.subr.mxu0 0.0
    %883 = vmatpush1.msra.mxu0 %v360
    %884 = vmatprep.subr.mxu0 0.0
    %885 = vmatpush1.msra.mxu0 %v361
    %886 = vmatprep.subr.mxu0 0.0
    %887 = vmatpush1.msra.mxu0 0.0
    %888 = vmatprep.subr.mxu0 0.0
    %889 = vmatpush1.msra.mxu0 0.0
    %890 = vmatprep.subr.mxu0 0.0
    %891 = vmatpush1.msra.mxu0 0.0
    %892 = vmatprep.subr.mxu0 0.0
    %893 = vmatpush1.msra.mxu0 0.0
    %894 = vmatprep.subr.mxu0 0.0
    %895 = vmatpush1.msra.mxu0 0.0
    %896 = vmatprep.subr.mxu0 0.0
    %897 = vmatpush1.msra.mxu0 0.0
    %898 = vmatprep.subr.mxu0 0.0
    %899 = vmatpush1.msra.mxu0 0.0
    %900 = vmatprep.subr.mxu0 0.0
    %901 = vmatpush1.msra.mxu0 0.0
    %902 = vmatprep.subr.mxu0 0.0
    %903 = vmatpush1.msra.mxu0 0.0
    %904 = vmatprep.subr.mxu0 0.0
    %905 = vmatpush1.msra.mxu0 0.0
    %906 = vmatprep.subr.mxu0 0.0
    %907 = vmatpush1.msra.mxu0 0.0
    %908 = vmatprep.subr.mxu0 0.0
    %909 = vmatpush1.msra.mxu0 0.0
    %910 = vmatprep.subr.mxu0 0.0
    %911 = vmatpush1.msra.mxu0 0.0
    %912 = vmatprep.subr.mxu0 0.0
    %913 = vmatpush1.msra.mxu0 0.0
    %914 = vmatprep.subr.mxu0 0.0
    %915 = vmatpush1.msra.mxu0 0.0
    %916 = vmatprep.subr.mxu0 0.0
    %917 = vmatpush1.msra.mxu0 0.0
    %918 = vmatprep.subr.mxu0 0.0
    %919 = vmatpush1.msra.mxu0 0.0
    %920 = vmatprep.subr.mxu0 0.0
    %921 = vmatpush1.msra.mxu0 0.0
    %922 = vmatprep.subr.mxu0 0.0
    %923 = vmatpush1.msra.mxu0 0.0
    %924 = vmatprep.subr.mxu0 0.0
    %925 = vmatpush1.msra.mxu0 0.0
    %926 = vmatprep.subr.mxu0 0.0
    %927 = vmatpush1.msra.mxu0 0.0
    %928 = vmatprep.subr.mxu0 0.0
    %929 = vmatpush1.msra.mxu0 0.0
    %930 = vmatprep.subr.mxu0 0.0
    %931 = vmatpush1.msra.mxu0 0.0
    %932 = vmatprep.subr.mxu0 0.0
    %933 = vmatpush1.msra.mxu0 0.0
    %934 = vmatprep.subr.mxu0 0.0
    %935 = vmatpush1.msra.mxu0 0.0
    %936 = vmatprep.subr.mxu0 0.0
    %937 = vmatpush1.msra.mxu0 0.0
    %938 = vmatprep.subr.mxu0 0.0
    %939 = vmatpush1.msra.mxu0 0.0
    %940 = vmatprep.subr.mxu0 0.0
    %941 = vmatpush1.msra.mxu0 0.0
    %942 = vmatprep.mubr.f32.mxu0 0.0
    %943 = vmatmul.mubr.f32.gmra.mrb[0].mxu0 %v876
    %v944 = vpop.f32.mrb[0].mxu0
    %v945 = vadd.f32 %v367, %v944
    %v946 = vpop.f32.mrb[0].mxu0
    %947 = vdwg.mxu0
    %v948 = vadd.f32 %v345, %v945
    %v949 = vxor.u32 %v948, 2147483648
    %v950 = vmul.f32 %v949, 1.442695
    %v951 = vpow.pop %v950
    %v952 = vadd.f32 %v951, 1.0
    %v953 = vrcp.pop %v952
    %v954 = vmul.f32 1.0, %v953
    %956 = vrot.lane.b32.xlu0 %v945, 64
    %v957 = vpop.permute.xlu0 %956
    %v959 = vmul.f32 %v954, %v957
    %961 = vrot.lane.b32.xlu0 %v959, 64
    %v962 = vpop.permute.xlu0 %961
    %v964 = vadd.f32 %v345, %v962
    %v965 = vtanh.pop %v964
    %v966 = vsub.f32 1.0, %v954
    %968 = vrot.lane.b32.xlu0 %v965, 96
    %v969 = vpop.permute.xlu0 %968
    %v971 = vmul.f32 %v966, %v969
    %v972 = vmul.f32 %v954, %v872
    %v973 = vadd.f32 %v971, %v972
    %975 = vrot.lane.b32.xlu0 %v973, 96
    %v976 = vpop.permute.xlu0 %975
    %v977 = vsel %vm369, %v976, 0
    %979 = vmatprep.subr.mxu0 0.0
    %980 = vmatpush1.msra.mxu0 %v358
    %981 = vmatprep.subr.mxu0 0.0
    %982 = vmatpush1.msra.mxu0 %v359
    %983 = vmatprep.subr.mxu0 0.0
    %984 = vmatpush1.msra.mxu0 %v360
    %985 = vmatprep.subr.mxu0 0.0
    %986 = vmatpush1.msra.mxu0 %v361
    %987 = vmatprep.subr.mxu0 0.0
    %988 = vmatpush1.msra.mxu0 0.0
    %989 = vmatprep.subr.mxu0 0.0
    %990 = vmatpush1.msra.mxu0 0.0
    %991 = vmatprep.subr.mxu0 0.0
    %992 = vmatpush1.msra.mxu0 0.0
    %993 = vmatprep.subr.mxu0 0.0
    %994 = vmatpush1.msra.mxu0 0.0
    %995 = vmatprep.subr.mxu0 0.0
    %996 = vmatpush1.msra.mxu0 0.0
    %997 = vmatprep.subr.mxu0 0.0
    %998 = vmatpush1.msra.mxu0 0.0
    %999 = vmatprep.subr.mxu0 0.0
    %1000 = vmatpush1.msra.mxu0 0.0
    %1001 = vmatprep.subr.mxu0 0.0
    %1002 = vmatpush1.msra.mxu0 0.0
    %1003 = vmatprep.subr.mxu0 0.0
    %1004 = vmatpush1.msra.mxu0 0.0
    %1005 = vmatprep.subr.mxu0 0.0
    %1006 = vmatpush1.msra.mxu0 0.0
    %1007 = vmatprep.subr.mxu0 0.0
    %1008 = vmatpush1.msra.mxu0 0.0
    %1009 = vmatprep.subr.mxu0 0.0
    %1010 = vmatpush1.msra.mxu0 0.0
    %1011 = vmatprep.subr.mxu0 0.0
    %1012 = vmatpush1.msra.mxu0 0.0
    %1013 = vmatprep.subr.mxu0 0.0
    %1014 = vmatpush1.msra.mxu0 0.0
    %1015 = vmatprep.subr.mxu0 0.0
    %1016 = vmatpush1.msra.mxu0 0.0
    %1017 = vmatprep.subr.mxu0 0.0
    %1018 = vmatpush1.msra.mxu0 0.0
    %1019 = vmatprep.subr.mxu0 0.0
    %1020 = vmatpush1.msra.mxu0 0.0
    %1021 = vmatprep.subr.mxu0 0.0
    %1022 = vmatpush1.msra.mxu0 0.0
    %1023 = vmatprep.subr.mxu0 0.0
    %1024 = vmatpush1.msra.mxu0 0.0
    %1025 = vmatprep.subr.mxu0 0.0
    %1026 = vmatpush1.msra.mxu0 0.0
    %1027 = vmatprep.subr.mxu0 0.0
    %1028 = vmatpush1.msra.mxu0 0.0
    %1029 = vmatprep.subr.mxu0 0.0
    %1030 = vmatpush1.msra.mxu0 0.0
    %1031 = vmatprep.subr.mxu0 0.0
    %1032 = vmatpush1.msra.mxu0 0.0
    %1033 = vmatprep.subr.mxu0 0.0
    %1034 = vmatpush1.msra.mxu0 0.0
    %1035 = vmatprep.subr.mxu0 0.0
    %1036 = vmatpush1.msra.mxu0 0.0
    %1037 = vmatprep.subr.mxu0 0.0
    %1038 = vmatpush1.msra.mxu0 0.0
    %1039 = vmatprep.subr.mxu0 0.0
    %1040 = vmatpush1.msra.mxu0 0.0
    %1041 = vmatprep.subr.mxu0 0.0
    %1042 = vmatpush1.msra.mxu0 0.0
    %1043 = vmatprep.mubr.f32.mxu0 0.0
    %1044 = vmatmul.mubr.f32.gmra.mrb[0].mxu0 %v977
    %v1045 = vpop.f32.mrb[0].mxu0
    %v1046 = vadd.f32 %v367, %v1045
    %v1047 = vpop.f32.mrb[0].mxu0
    %1048 = vdwg.mxu0
    %v1049 = vadd.f32 %v350, %v1046
    %v1050 = vxor.u32 %v1049, 2147483648
    %v1051 = vmul.f32 %v1050, 1.442695
    %v1052 = vpow.pop %v1051
    %v1053 = vadd.f32 %v1052, 1.0
    %v1054 = vrcp.pop %v1053
    %v1055 = vmul.f32 1.0, %v1054
    %1057 = vrot.lane.b32.xlu0 %v1046, 64
    %v1058 = vpop.permute.xlu0 %1057
    %v1060 = vmul.f32 %v1055, %v1058
    %1062 = vrot.lane.b32.xlu0 %v1060, 64
    %v1063 = vpop.permute.xlu0 %1062
    %v1065 = vadd.f32 %v350, %v1063
    %v1066 = vtanh.pop %v1065
    %v1067 = vsub.f32 1.0, %v1055
    %1069 = vrot.lane.b32.xlu0 %v1066, 96
    %v1070 = vpop.permute.xlu0 %1069
    %v1072 = vmul.f32 %v1067, %v1070
    %v1073 = vmul.f32 %v1055, %v973
    %v1074 = vadd.f32 %v1072, %v1073
    %1076 = vrot.lane.b32.xlu0 %v1074, 96
    %v1077 = vpop.permute.xlu0 %1076
    %v1078 = vsel %vm369, %v1077, 0
    %1080 = vmatprep.subr.mxu0 0.0
    %1081 = vmatpush1.msra.mxu0 %v358
    %1082 = vmatprep.subr.mxu0 0.0
    %1083 = vmatpush1.msra.mxu0 %v359
    %1084 = vmatprep.subr.mxu0 0.0
    %1085 = vmatpush1.msra.mxu0 %v360
    %1086 = vmatprep.subr.mxu0 0.0
    %1087 = vmatpush1.msra.mxu0 %v361
    %1088 = vmatprep.subr.mxu0 0.0
    %1089 = vmatpush1.msra.mxu0 0.0
    %1090 = vmatprep.subr.mxu0 0.0
    %1091 = vmatpush1.msra.mxu0 0.0
    %1092 = vmatprep.subr.mxu0 0.0
    %1093 = vmatpush1.msra.mxu0 0.0
    %1094 = vmatprep.subr.mxu0 0.0
    %1095 = vmatpush1.msra.mxu0 0.0
    %1096 = vmatprep.subr.mxu0 0.0
    %1097 = vmatpush1.msra.mxu0 0.0
    %1098 = vmatprep.subr.mxu0 0.0
    %1099 = vmatpush1.msra.mxu0 0.0
    %1100 = vmatprep.subr.mxu0 0.0
    %1101 = vmatpush1.msra.mxu0 0.0
    %1102 = vmatprep.subr.mxu0 0.0
    %1103 = vmatpush1.msra.mxu0 0.0
    %1104 = vmatprep.subr.mxu0 0.0
    %1105 = vmatpush1.msra.mxu0 0.0
    %1106 = vmatprep.subr.mxu0 0.0
    %1107 = vmatpush1.msra.mxu0 0.0
    %1108 = vmatprep.subr.mxu0 0.0
    %1109 = vmatpush1.msra.mxu0 0.0
    %1110 = vmatprep.subr.mxu0 0.0
    %1111 = vmatpush1.msra.mxu0 0.0
    %1112 = vmatprep.subr.mxu0 0.0
    %1113 = vmatpush1.msra.mxu0 0.0
    %1114 = vmatprep.subr.mxu0 0.0
    %1115 = vmatpush1.msra.mxu0 0.0
    %1116 = vmatprep.subr.mxu0 0.0
    %1117 = vmatpush1.msra.mxu0 0.0
    %1118 = vmatprep.subr.mxu0 0.0
    %1119 = vmatpush1.msra.mxu0 0.0
    %1120 = vmatprep.subr.mxu0 0.0
    %1121 = vmatpush1.msra.mxu0 0.0
    %1122 = vmatprep.subr.mxu0 0.0
    %1123 = vmatpush1.msra.mxu0 0.0
    %1124 = vmatprep.subr.mxu0 0.0
    %1125 = vmatpush1.msra.mxu0 0.0
    %1126 = vmatprep.subr.mxu0 0.0
    %1127 = vmatpush1.msra.mxu0 0.0
    %1128 = vmatprep.subr.mxu0 0.0
    %1129 = vmatpush1.msra.mxu0 0.0
    %1130 = vmatprep.subr.mxu0 0.0
    %1131 = vmatpush1.msra.mxu0 0.0
    %1132 = vmatprep.subr.mxu0 0.0
    %1133 = vmatpush1.msra.mxu0 0.0
    %1134 = vmatprep.subr.mxu0 0.0
    %1135 = vmatpush1.msra.mxu0 0.0
    %1136 = vmatprep.subr.mxu0 0.0
    %1137 = vmatpush1.msra.mxu0 0.0
    %1138 = vmatprep.subr.mxu0 0.0
    %1139 = vmatpush1.msra.mxu0 0.0
    %1140 = vmatprep.subr.mxu0 0.0
    %1141 = vmatpush1.msra.mxu0 0.0
    %1142 = vmatprep.subr.mxu0 0.0
    %1143 = vmatpush1.msra.mxu0 0.0
    %1144 = vmatprep.mubr.f32.mxu0 0.0
    %1145 = vmatmul.mubr.f32.gmra.mrb[0].mxu0 %v1078
    %v1146 = vpop.f32.mrb[0].mxu0
    %v1147 = vadd.f32 %v367, %v1146
    %v1148 = vpop.f32.mrb[0].mxu0
    %1149 = vdwg.mxu0
    %v1150 = vadd.f32 %v355, %v1147
    %v1151 = vxor.u32 %v1150, 2147483648
    %v1152 = vmul.f32 %v1151, 1.442695
    %v1153 = vpow.pop %v1152
    %v1154 = vadd.f32 %v1153, 1.0
    %v1155 = vrcp.pop %v1154
    %v1156 = vmul.f32 1.0, %v1155
    %1158 = vrot.lane.b32.xlu0 %v1147, 64
    %v1159 = vpop.permute.xlu0 %1158
    %v1161 = vmul.f32 %v1156, %v1159
    %1163 = vrot.lane.b32.xlu0 %v1161, 64
    %v1164 = vpop.permute.xlu0 %1163
    %v1166 = vadd.f32 %v355, %v1164
    %v1167 = vtanh.pop %v1166
    %v1168 = vsub.f32 1.0, %v1156
    %1170 = vrot.lane.b32.xlu0 %v1167, 96
    %v1171 = vpop.permute.xlu0 %1170
    %v1173 = vmul.f32 %v1168, %v1171
    %v1174 = vmul.f32 %v1156, %v1074
    %v1175 = vadd.f32 %v1173, %v1174
    %s1176 = sld [smem:[#allocation2]]
    %vm1177 = vcmp.ge.f32.partialorder %v1175, 0.0
    %v1178 = vstv %s1176
    %v1179 = vmul.f32 %v1178, %v1175
    %v1180 = vsel %vm1177, %v1175, %v1179
    %v1181 = vld [vmem:[%s5] sm:$0xff]
    %v1182 = vld [vmem:[%s5 + $0x8] sm:$0xff]
    %v1183 = vld [vmem:[%s5 + $0x10] sm:$0xff]
    %v1184 = vld [vmem:[%s5 + $0x18] sm:$0xff]
    %v1185 = vld [vmem:[%s6] sm:$0x1]
    %v1187 = vlaneseq
    %v1188 = vshrl.u32 %v1187, 7
    %v1189 = vsub.s32 0, %v1188
    %v1190 = vrot.slane %v1185, %v1189
    %1193 = vrot.lane.b32.xlu0 %v1180, 96
    %v1194 = vpop.permute.xlu0 %1193
    %v1195 = vsel %vm369, %v1194, 0
    %1197 = vmatprep.subr.mxu0 0.0
    %1198 = vmatpush1.msra.mxu0 %v1181
    %1199 = vmatprep.subr.mxu0 0.0
    %1200 = vmatpush1.msra.mxu0 %v1182
    %1201 = vmatprep.subr.mxu0 0.0
    %1202 = vmatpush1.msra.mxu0 %v1183
    %1203 = vmatprep.subr.mxu0 0.0
    %1204 = vmatpush1.msra.mxu0 %v1184
    %1205 = vmatprep.subr.mxu0 0.0
    %1206 = vmatpush1.msra.mxu0 0.0
    %1207 = vmatprep.subr.mxu0 0.0
    %1208 = vmatpush1.msra.mxu0 0.0
    %1209 = vmatprep.subr.mxu0 0.0
    %1210 = vmatpush1.msra.mxu0 0.0
    %1211 = vmatprep.subr.mxu0 0.0
    %1212 = vmatpush1.msra.mxu0 0.0
    %1213 = vmatprep.subr.mxu0 0.0
    %1214 = vmatpush1.msra.mxu0 0.0
    %1215 = vmatprep.subr.mxu0 0.0
    %1216 = vmatpush1.msra.mxu0 0.0
    %1217 = vmatprep.subr.mxu0 0.0
    %1218 = vmatpush1.msra.mxu0 0.0
    %1219 = vmatprep.subr.mxu0 0.0
    %1220 = vmatpush1.msra.mxu0 0.0
    %1221 = vmatprep.subr.mxu0 0.0
    %1222 = vmatpush1.msra.mxu0 0.0
    %1223 = vmatprep.subr.mxu0 0.0
    %1224 = vmatpush1.msra.mxu0 0.0
    %1225 = vmatprep.subr.mxu0 0.0
    %1226 = vmatpush1.msra.mxu0 0.0
    %1227 = vmatprep.subr.mxu0 0.0
    %1228 = vmatpush1.msra.mxu0 0.0
    %1229 = vmatprep.subr.mxu0 0.0
    %1230 = vmatpush1.msra.mxu0 0.0
    %1231 = vmatprep.subr.mxu0 0.0
    %1232 = vmatpush1.msra.mxu0 0.0
    %1233 = vmatprep.subr.mxu0 0.0
    %1234 = vmatpush1.msra.mxu0 0.0
    %1235 = vmatprep.subr.mxu0 0.0
    %1236 = vmatpush1.msra.mxu0 0.0
    %1237 = vmatprep.subr.mxu0 0.0
    %1238 = vmatpush1.msra.mxu0 0.0
    %1239 = vmatprep.subr.mxu0 0.0
    %1240 = vmatpush1.msra.mxu0 0.0
    %1241 = vmatprep.subr.mxu0 0.0
    %1242 = vmatpush1.msra.mxu0 0.0
    %1243 = vmatprep.subr.mxu0 0.0
    %1244 = vmatpush1.msra.mxu0 0.0
    %1245 = vmatprep.subr.mxu0 0.0
    %1246 = vmatpush1.msra.mxu0 0.0
    %1247 = vmatprep.subr.mxu0 0.0
    %1248 = vmatpush1.msra.mxu0 0.0
    %1249 = vmatprep.subr.mxu0 0.0
    %1250 = vmatpush1.msra.mxu0 0.0
    %1251 = vmatprep.subr.mxu0 0.0
    %1252 = vmatpush1.msra.mxu0 0.0
    %1253 = vmatprep.subr.mxu0 0.0
    %1254 = vmatpush1.msra.mxu0 0.0
    %1255 = vmatprep.subr.mxu0 0.0
    %1256 = vmatpush1.msra.mxu0 0.0
    %1257 = vmatprep.subr.mxu0 0.0
    %1258 = vmatpush1.msra.mxu0 0.0
    %1259 = vmatprep.subr.mxu0 0.0
    %1260 = vmatpush1.msra.mxu0 0.0
    %1261 = vmatprep.mubr.f32.mxu0 0.0
    %1262 = vmatmul.mubr.f32.gmra.mrb[0].mxu0 %v1195
    %v1263 = vpop.f32.mrb[0].mxu0
    %v1264 = vadd.f32 %v1190, %v1263
    %v1265 = vpop.f32.mrb[0].mxu0
    %1266 = vdwg.mxu0
    %vm1267 = vcmask 195584
    %1268 = vst.msk [vmem:[#allocation3] sm:$0xff] %vm1267, %v1264
    // Predicated region
    $region30: #{tpu_custom_call.1} parent=1 // pred_check
      _
    $region31: #{tpu_custom_call.1} parent=1 // pred_check_branch
      %1270 = sbr.rel (0) target = $region33
    $region32: #{tpu_custom_call.1} parent=1 // pred_region
      %s1272 = ssub.s32 128, 128
      %1273 = vsyncadd [#allocation4], %s1272
      %s1275 = sshll.u32 [#allocation3], 4
      %s1276 = int_to_ptr.vmem [resolvable:$true] %s1275
      %1278 = dma.vmem_to_hbm [thread:$0]  %s1276, 128, %s7, [#allocation4]
    $region33: #{tpu_custom_call.1} parent=1 // pred_fallthru
      _
    // Predicated region
    $region34: #{tpu_custom_call.1} parent=1 // pred_check
      _
    $region35: #{tpu_custom_call.1} parent=1 // pred_check_branch
      %1280 = sbr.rel (0) target = $region37
    $region36: #{tpu_custom_call.1} parent=1 // pred_region
      %1281 = dma.done [#allocation4], 128
    $region37: #{tpu_custom_call.1} parent=1 // pred_fallthru
      _
    %1282 = vsyncpa [#allocation4], 1

</llo_original>
